<compile_context>
chip_gen: v6e
topology: v6e:2x2x1
jax: 0.10.0
libtpu: 0.0.40
codegen_flags: <defaults>
</compile_context>

<pallas_src>
import math

import jax
import jax.numpy as jnp
from jax.experimental import pallas as pl
from jax.experimental.pallas import tpu as pltpu

HEAD_ROWS = 8  # sublane-padded row count for the 3-wide point_offset head


# ----------------------------------- kernel -----------------------------------

def _decoder_kernel(feat_ref, sampT_ref, wbT_ref, bb_ref,
                    w1fT_ref, pb1_ref, w2fT_ref, pb2_ref,
                    w3fT_ref, pb3_ref, wofT_ref, pbo_ref, ptsT_ref,
                    out_ref):
    """Single grid step; whole batch folded into the lane axis (columns = B*V)."""
    bf16 = jnp.bfloat16
    f32 = jnp.float32
    B = feat_ref.shape[0]

    sampT = sampT_ref[...]        # (HW, V) bf16, shared across the batch
    wbT = wbT_ref[...]            # (Hd, C) bf16

    # vert_align + bottleneck, reassociated per batch: (Wb^T @ feat_b) @ S^T -> (Hd, V)
    zs = []
    for b in range(B):            # static unroll; B is a small compile-time constant
        fb = jnp.dot(wbT, feat_ref[b], preferred_element_type=f32)              # (Hd, HW)
        zs.append(jnp.dot(fb.astype(bf16), sampT, preferred_element_type=f32))  # (Hd, V)
    z = jnp.concatenate(zs, axis=-1)                                             # (Hd, B*V)
    h = jnp.maximum(z + bb_ref[...], 0.0)        # bb is (Hd, 1): broadcast along lanes

    # fc1..fc3:  cat([h, pts]) @ W  ==  Wf^T @ h + (pts @ Wp + b)^T  (latter precomputed)
    h = jnp.maximum(jnp.dot(w1fT_ref[...], h.astype(bf16),
                            preferred_element_type=f32) + pb1_ref[...], 0.0)
    h = jnp.maximum(jnp.dot(w2fT_ref[...], h.astype(bf16),
                            preferred_element_type=f32) + pb2_ref[...], 0.0)
    h = jnp.maximum(jnp.dot(w3fT_ref[...], h.astype(bf16),
                            preferred_element_type=f32) + pb3_ref[...], 0.0)

    # point_offset head, sublane-padded to HEAD_ROWS; rows 3..7 are zero by construction.
    off = jnp.tanh(jnp.dot(wofT_ref[...], h.astype(bf16),
                           preferred_element_type=f32) + pbo_ref[...])           # (8, B*V)
    out_ref[...] = (ptsT_ref[...] + off).astype(out_ref.dtype)                   # (8, B*V)


# ------------------------- one-time (hoisted) precompute -----------------------

def _bilinear_sample_matrix(pts, H, W):
    """S (V, H*W) with S @ feat_hw == F.grid_sample(bilinear, zeros, align_corners=True).

    Vectorized one-hot construction (no scatter-adds)."""
    HW = H * W
    px, py = pts[:, 0], pts[:, 1]
    ix = (px + 1.0) * 0.5 * (W - 1)
    iy = (py + 1.0) * 0.5 * (H - 1)
    ix0 = jnp.floor(ix); iy0 = jnp.floor(iy)
    ix1 = ix0 + 1.0;     iy1 = iy0 + 1.0
    wx1 = ix - ix0; wx0 = 1.0 - wx1
    wy1 = iy - iy0; wy0 = 1.0 - wy1
    cols = jnp.arange(HW, dtype=jnp.int32)[None, :]                    # (1, HW)
    samp = jnp.zeros((pts.shape[0], HW), jnp.float32)
    for iyc, ixc, w in ((iy0, ix0, wy0 * wx0), (iy0, ix1, wy0 * wx1),
                        (iy1, ix0, wy1 * wx0), (iy1, ix1, wy1 * wx1)):
        valid = (ixc >= 0) & (ixc <= W - 1) & (iyc >= 0) & (iyc <= H - 1)
        col = (jnp.clip(iyc, 0, H - 1).astype(jnp.int32) * W
               + jnp.clip(ixc, 0, W - 1).astype(jnp.int32))            # (V,)
        onehot = (cols == col[:, None]).astype(jnp.float32)            # (V, HW)
        samp = samp + onehot * jnp.where(valid, w, 0.0)[:, None]
    return samp


def make_decoder(points, params, batch_size, H, W):
    """Precompute every grid-invariant slab ONCE (depends only on points/params);
    return a jitted decoder(x) whose per-call work is just the Pallas kernel."""
    assert points.shape[0] == 1, "points must be shared across the batch: shape (1, V, 3)"
    f32, bf16 = jnp.float32, jnp.bfloat16
    V = points.shape[1]
    C, Hd = params["Wb"].shape
    B = batch_size
    HW = H * W

    factor = jnp.array([1.0, -1.0, 1.0], f32)
    pts = points[0].astype(f32) * factor                               # (V, 3)

    # TODO(synk): for H*W >~ 2K, replace the dense S matmul with a DMA / pl.Element
    # gather of the 4 bilinear taps instead of materializing S.
    sampT = _bilinear_sample_matrix(pts, H, W).T.astype(bf16)          # (HW, V)
    WbT = params["Wb"].T.astype(bf16)                                  # (Hd, C)
    bb_col = params["bb"].astype(f32).reshape(Hd, 1)                   # (Hd, 1), bcast in-kernel

    def fc_parts(Wname, bname):
        Wfull, b = params[Wname], params[bname]
        WfT = Wfull[:Hd].T.astype(bf16)                                # (out, Hd)
        pb = (pts @ Wfull[Hd:] + b).T.astype(f32)                      # (out, V)
        return WfT, jnp.tile(pb, (1, B))                               # (out, B*V)

    W1fT, pb1 = fc_parts("W1", "b1")
    W2fT, pb2 = fc_parts("W2", "b2")
    W3fT, pb3 = fc_parts("W3", "b3")
    WofT3, pbo3 = fc_parts("Wo", "bo")                                 # (3, Hd), (3, B*V)
    WofT = jnp.zeros((HEAD_ROWS, Hd), bf16).at[:3].set(WofT3)          # sublane-pad to 8
    pbo = jnp.zeros((HEAD_ROWS, B * V), f32).at[:3].set(pbo3)
    ptsT = jnp.zeros((HEAD_ROWS, B * V), f32).at[:3].set(jnp.tile(pts.T, (1, B)))

    fixed_args = tuple(jax.block_until_ready(a) for a in
                       (sampT, WbT, bb_col, W1fT, pb1, W2fT, pb2, W3fT, pb3,
                        WofT, pbo, ptsT))

    # ------- pallas_call (single grid step; batch folded into the lane axis) -------
    feat_bytes = B * C * HW * 2                                        # bf16
    out_bytes = HEAD_ROWS * B * V * 4                                  # f32
    fixed_bytes = sum(int(a.size) * a.dtype.itemsize for a in fixed_args)
    # VMEM budget: pipelined blocks x2 + fixed slabs (counted x2, conservative) + margin.
    vmem_limit = int(min(max(2 * (feat_bytes + out_bytes + fixed_bytes) + (2 << 20),
                             8 << 20), 64 << 20))

    flops = 2 * (B * (Hd * C * HW + Hd * HW * V)
                 + 3 * Hd * Hd * B * V + HEAD_ROWS * Hd * B * V)
    cost = pl.CostEstimate(flops=flops,
                           transcendentals=HEAD_ROWS * B * V,
                           bytes_accessed=feat_bytes + fixed_bytes + out_bytes)

    grid_spec = pltpu.PrefetchScalarGridSpec(
        num_scalar_prefetch=0,
        grid=(1,),
        in_specs=[pl.BlockSpec((B, C, HW), lambda i: (0, 0, 0))]
                 + [pl.BlockSpec(a.shape, lambda i, _nd=a.ndim: (0,) * _nd)
                    for a in fixed_args],
        out_specs=pl.BlockSpec((HEAD_ROWS, B * V), lambda i: (0, 0)),
    )

    call = pl.pallas_call(
        _decoder_kernel,
        out_shape=jax.ShapeDtypeStruct((HEAD_ROWS, B * V), f32),
        grid_spec=grid_spec,
        compiler_params=pltpu.CompilerParams(
            dimension_semantics=("arbitrary",),      # single step; no loop to parallelize
            vmem_limit_bytes=vmem_limit),
        cost_estimate=cost,
    )

    @jax.jit
    def decoder(x_nchw):
        assert x_nchw.shape == (B, C, H, W), x_nchw.shape
        # Free reshape: the feature map stays in its native NCHW layout.
        feat = x_nchw.reshape(B, C, HW).astype(bf16)
        out_t = call(feat, *fixed_args)                  # (8, B*V), lane-dense
        out = out_t.reshape(HEAD_ROWS, B, V)[:3]         # (3, B, V)
        return jnp.transpose(out, (1, 2, 0)).astype(x_nchw.dtype)   # (B, V, 3)

    return decoder


# ----------------------------- pure-JAX reference -----------------------------

def _grid_sample_ref(feat, grid):
    """F.grid_sample, bilinear, zeros padding, align_corners=True. feat NCHW, grid (B,V,2)."""
    B, C, H, W = feat.shape
    x = grid[..., 0]
    y = grid[..., 1]
    ix = (x + 1.0) * 0.5 * (W - 1)
    iy = (y + 1.0) * 0.5 * (H - 1)
    ix0 = jnp.floor(ix); iy0 = jnp.floor(iy)
    ix1 = ix0 + 1.0;     iy1 = iy0 + 1.0
    wx1 = ix - ix0; wx0 = 1.0 - wx1
    wy1 = iy - iy0; wy0 = 1.0 - wy1

    def gather(iyc, ixc):
        valid = (ixc >= 0) & (ixc <= W - 1) & (iyc >= 0) & (iyc <= H - 1)
        xi = jnp.clip(ixc, 0, W - 1).astype(jnp.int32)
        yi = jnp.clip(iyc, 0, H - 1).astype(jnp.int32)

        def per_batch(f, yy, xx, vv):
            v = f[:, yy, xx]                       # (C, V)
            return jnp.where(vv[None, :], v, 0.0)

        return jax.vmap(per_batch)(feat, yi, xi, valid)   # (B, C, V)

    out = (gather(iy0, ix0) * (wy0 * wx0)[:, None, :]
           + gather(iy0, ix1) * (wy0 * wx1)[:, None, :]
           + gather(iy1, ix0) * (wy1 * wx0)[:, None, :]
           + gather(iy1, ix1) * (wy1 * wx1)[:, None, :])
    return jnp.transpose(out, (0, 2, 1))                  # (B, V, C)


def decoder_ref(x_nchw, points, params):
    B = x_nchw.shape[0]
    hi = jax.lax.Precision.HIGHEST
    factor = jnp.array([1.0, -1.0, 1.0], dtype=x_nchw.dtype).reshape(1, 1, 3)
    ps = jnp.tile(points, (B, 1, 1)) * factor
    feats = _grid_sample_ref(x_nchw, ps[..., :2])
    h = jax.nn.relu(jnp.dot(feats, params["Wb"], precision=hi) + params["bb"])
    for wname, bname in (("W1", "b1"), ("W2", "b2"), ("W3", "b3")):
        cat = jnp.concatenate([h, ps], axis=-1)
        h = jax.nn.relu(jnp.dot(cat, params[wname], precision=hi) + params[bname])
    cat = jnp.concatenate([h, ps], axis=-1)
    off = jnp.tanh(jnp.dot(cat, params["Wo"], precision=hi) + params["bo"])
    return ps + off


if __name__ == "__main__":
    B, C, H, W = 2, 128, 8, 8       # x in NCHW, like the PyTorch module (input_dim=C)
    Hd, V = 128, 128                # hidden_dim, number of sphere points

    key = jax.random.PRNGKey(0)
    keys = jax.random.split(key, 8)
    x = jax.random.normal(keys[0], (B, C, H, W), jnp.float32)
    points = jax.random.normal(keys[1], (1, V, 3), jnp.float32)

    def linear_init(k, fan_in, fan_out):
        kw, kb = jax.random.split(k)
        bound = 1.0 / math.sqrt(fan_in)
        w = jax.random.uniform(kw, (fan_in, fan_out), jnp.float32, -bound, bound)
        b = jax.random.uniform(kb, (fan_out,), jnp.float32, -bound, bound)
        return w, b

    Wb, bb = linear_init(keys[2], C, Hd)
    W1, b1 = linear_init(keys[3], Hd + 3, Hd)
    W2, b2 = linear_init(keys[4], Hd + 3, Hd)
    W3, b3 = linear_init(keys[5], Hd + 3, Hd)
    Wo, bo = linear_init(keys[6], Hd + 3, 3)
    params = dict(Wb=Wb, bb=bb, W1=W1, b1=b1, W2=W2, b2=b2, W3=W3, b3=b3, Wo=Wo, bo=bo)

    # Grid-invariant precompute happens ONCE here; per-call path is kernel-only.
    decoder = make_decoder(points, params, batch_size=B, H=H, W=W)

    out = decoder(x)
    out = jax.block_until_ready(out)

    ref = decoder_ref(x, points, params)
    err = float(jnp.max(jnp.abs(out - ref)))
    assert out.shape == (B, V, 3), out.shape
    assert err < 2e-2, f"max abs error vs reference = {err}"   # bf16 MXU inputs, f32 accum
    print("KERNEL_OK")
</pallas_src>

<mosaic_0001>
module attributes {stable_mosaic.version = 11 : i64} {
  func.func @_decoder_kernel(%arg0: i32, %arg1: memref<2x128x64xbf16, #tpu.memory_space<vmem>>, %arg2: memref<64x128xbf16, #tpu.memory_space<vmem>>, %arg3: memref<128x128xbf16, #tpu.memory_space<vmem>>, %arg4: memref<128x1xf32, #tpu.memory_space<vmem>>, %arg5: memref<128x128xbf16, #tpu.memory_space<vmem>>, %arg6: memref<128x256xf32, #tpu.memory_space<vmem>>, %arg7: memref<128x128xbf16, #tpu.memory_space<vmem>>, %arg8: memref<128x256xf32, #tpu.memory_space<vmem>>, %arg9: memref<128x128xbf16, #tpu.memory_space<vmem>>, %arg10: memref<128x256xf32, #tpu.memory_space<vmem>>, %arg11: memref<8x128xbf16, #tpu.memory_space<vmem>>, %arg12: memref<8x256xf32, #tpu.memory_space<vmem>>, %arg13: memref<8x256xf32, #tpu.memory_space<vmem>>, %arg14: memref<8x256xf32, #tpu.memory_space<vmem>>) attributes {dimension_semantics = [#tpu.dimension_semantics<arbitrary>], iteration_bounds = array<i64: 1>, scalar_prefetch = 0 : i64, scratch_operands = 0 : i64, tpu.core_type = #tpu.core_type<tc>, window_params = [{pipeline_mode = #tpu.pipeline_mode<synchronous>, transform_indices = @transform_0, window_bounds = array<i64: 2, 128, 64>}, {pipeline_mode = #tpu.pipeline_mode<synchronous>, transform_indices = @transform_1, window_bounds = array<i64: 64, 128>}, {pipeline_mode = #tpu.pipeline_mode<synchronous>, transform_indices = @transform_2, window_bounds = array<i64: 128, 128>}, {pipeline_mode = #tpu.pipeline_mode<synchronous>, transform_indices = @transform_3, window_bounds = array<i64: 128, 1>}, {pipeline_mode = #tpu.pipeline_mode<synchronous>, transform_indices = @transform_4, window_bounds = array<i64: 128, 128>}, {pipeline_mode = #tpu.pipeline_mode<synchronous>, transform_indices = @transform_5, window_bounds = array<i64: 128, 256>}, {pipeline_mode = #tpu.pipeline_mode<synchronous>, transform_indices = @transform_6, window_bounds = array<i64: 128, 128>}, {pipeline_mode = #tpu.pipeline_mode<synchronous>, transform_indices = @transform_7, window_bounds = array<i64: 128, 256>}, {pipeline_mode = #tpu.pipeline_mode<synchronous>, transform_indices = @transform_8, window_bounds = array<i64: 128, 128>}, {pipeline_mode = #tpu.pipeline_mode<synchronous>, transform_indices = @transform_9, window_bounds = array<i64: 128, 256>}, {pipeline_mode = #tpu.pipeline_mode<synchronous>, transform_indices = @transform_10, window_bounds = array<i64: 8, 128>}, {pipeline_mode = #tpu.pipeline_mode<synchronous>, transform_indices = @transform_11, window_bounds = array<i64: 8, 256>}, {pipeline_mode = #tpu.pipeline_mode<synchronous>, transform_indices = @transform_12, window_bounds = array<i64: 8, 256>}, {pipeline_mode = #tpu.pipeline_mode<synchronous>, transform_indices = @transform_13, window_bounds = array<i64: 8, 256>}]} {
    %c0 = arith.constant 0 : index
    %c0_0 = arith.constant 0 : index
    %0 = vector.load %arg2[%c0, %c0_0] : memref<64x128xbf16, #tpu.memory_space<vmem>>, vector<64x128xbf16>
    %c0_1 = arith.constant 0 : index
    %c0_2 = arith.constant 0 : index
    %1 = vector.load %arg3[%c0_1, %c0_2] : memref<128x128xbf16, #tpu.memory_space<vmem>>, vector<128x128xbf16>
    %c0_3 = arith.constant 0 : index
    %c0_4 = arith.constant 0 : index
    %c0_5 = arith.constant 0 : index
    %2 = vector.load %arg1[%c0_3, %c0_4, %c0_5] : memref<2x128x64xbf16, #tpu.memory_space<vmem>>, vector<1x128x64xbf16>
    %3 = vector.shape_cast %2 : vector<1x128x64xbf16> to vector<128x64xbf16>
    %cst = arith.constant dense<0.000000e+00> : vector<128x64xf32>
    %4 = tpu.matmul %1, %3, %cst {dimension_numbers = #tpu.dot_dimension_numbers<[1], [0], [0], [1], [0, 0, 1, 1], [], []>} : vector<128x128xbf16>, vector<128x64xbf16>, vector<128x64xf32> -> vector<128x64xf32>
    %5 = arith.truncf %4 : vector<128x64xf32> to vector<128x64xbf16>
    %cst_6 = arith.constant dense<0.000000e+00> : vector<128x128xf32>
    %6 = tpu.matmul %5, %0, %cst_6 {dimension_numbers = #tpu.dot_dimension_numbers<[1], [0], [0], [1], [0, 0, 1, 1], [], []>} : vector<128x64xbf16>, vector<64x128xbf16>, vector<128x128xf32> -> vector<128x128xf32>
    %c1 = arith.constant 1 : index
    %c0_7 = arith.constant 0 : index
    %c0_8 = arith.constant 0 : index
    %7 = vector.load %arg1[%c1, %c0_7, %c0_8] : memref<2x128x64xbf16, #tpu.memory_space<vmem>>, vector<1x128x64xbf16>
    %8 = vector.shape_cast %7 : vector<1x128x64xbf16> to vector<128x64xbf16>
    %cst_9 = arith.constant dense<0.000000e+00> : vector<128x64xf32>
    %9 = tpu.matmul %1, %8, %cst_9 {dimension_numbers = #tpu.dot_dimension_numbers<[1], [0], [0], [1], [0, 0, 1, 1], [], []>} : vector<128x128xbf16>, vector<128x64xbf16>, vector<128x64xf32> -> vector<128x64xf32>
    %10 = arith.truncf %9 : vector<128x64xf32> to vector<128x64xbf16>
    %cst_10 = arith.constant dense<0.000000e+00> : vector<128x128xf32>
    %11 = tpu.matmul %10, %0, %cst_10 {dimension_numbers = #tpu.dot_dimension_numbers<[1], [0], [0], [1], [0, 0, 1, 1], [], []>} : vector<128x64xbf16>, vector<64x128xbf16>, vector<128x128xf32> -> vector<128x128xf32>
    %12 = tpu.concatenate %6, %11 in 1 : vector<128x128xf32>, vector<128x128xf32> -> vector<128x256xf32>
    %c0_11 = arith.constant 0 : index
    %c0_12 = arith.constant 0 : index
    %13 = vector.load %arg4[%c0_11, %c0_12] : memref<128x1xf32, #tpu.memory_space<vmem>>, vector<128x1xf32>
    %14 = vector.broadcast %13 : vector<128x1xf32> to vector<128x256xf32>
    %15 = arith.addf %12, %14 : vector<128x256xf32>
    %cst_13 = arith.constant 0.000000e+00 : f32
    %16 = vector.broadcast %cst_13 : f32 to vector<128x256xf32>
    %17 = arith.maximumf %15, %16 : vector<128x256xf32>
    %c0_14 = arith.constant 0 : index
    %c0_15 = arith.constant 0 : index
    %18 = vector.load %arg5[%c0_14, %c0_15] : memref<128x128xbf16, #tpu.memory_space<vmem>>, vector<128x128xbf16>
    %19 = arith.truncf %17 : vector<128x256xf32> to vector<128x256xbf16>
    %cst_16 = arith.constant dense<0.000000e+00> : vector<128x256xf32>
    %20 = tpu.matmul %18, %19, %cst_16 {dimension_numbers = #tpu.dot_dimension_numbers<[1], [0], [0], [1], [0, 0, 1, 1], [], []>} : vector<128x128xbf16>, vector<128x256xbf16>, vector<128x256xf32> -> vector<128x256xf32>
    %c0_17 = arith.constant 0 : index
    %c0_18 = arith.constant 0 : index
    %21 = vector.load %arg6[%c0_17, %c0_18] : memref<128x256xf32, #tpu.memory_space<vmem>>, vector<128x256xf32>
    %22 = arith.addf %20, %21 : vector<128x256xf32>
    %cst_19 = arith.constant 0.000000e+00 : f32
    %23 = vector.broadcast %cst_19 : f32 to vector<128x256xf32>
    %24 = arith.maximumf %22, %23 : vector<128x256xf32>
    %c0_20 = arith.constant 0 : index
    %c0_21 = arith.constant 0 : index
    %25 = vector.load %arg7[%c0_20, %c0_21] : memref<128x128xbf16, #tpu.memory_space<vmem>>, vector<128x128xbf16>
    %26 = arith.truncf %24 : vector<128x256xf32> to vector<128x256xbf16>
    %cst_22 = arith.constant dense<0.000000e+00> : vector<128x256xf32>
    %27 = tpu.matmul %25, %26, %cst_22 {dimension_numbers = #tpu.dot_dimension_numbers<[1], [0], [0], [1], [0, 0, 1, 1], [], []>} : vector<128x128xbf16>, vector<128x256xbf16>, vector<128x256xf32> -> vector<128x256xf32>
    %c0_23 = arith.constant 0 : index
    %c0_24 = arith.constant 0 : index
    %28 = vector.load %arg8[%c0_23, %c0_24] : memref<128x256xf32, #tpu.memory_space<vmem>>, vector<128x256xf32>
    %29 = arith.addf %27, %28 : vector<128x256xf32>
    %cst_25 = arith.constant 0.000000e+00 : f32
    %30 = vector.broadcast %cst_25 : f32 to vector<128x256xf32>
    %31 = arith.maximumf %29, %30 : vector<128x256xf32>
    %c0_26 = arith.constant 0 : index
    %c0_27 = arith.constant 0 : index
    %32 = vector.load %arg9[%c0_26, %c0_27] : memref<128x128xbf16, #tpu.memory_space<vmem>>, vector<128x128xbf16>
    %33 = arith.truncf %31 : vector<128x256xf32> to vector<128x256xbf16>
    %cst_28 = arith.constant dense<0.000000e+00> : vector<128x256xf32>
    %34 = tpu.matmul %32, %33, %cst_28 {dimension_numbers = #tpu.dot_dimension_numbers<[1], [0], [0], [1], [0, 0, 1, 1], [], []>} : vector<128x128xbf16>, vector<128x256xbf16>, vector<128x256xf32> -> vector<128x256xf32>
    %c0_29 = arith.constant 0 : index
    %c0_30 = arith.constant 0 : index
    %35 = vector.load %arg10[%c0_29, %c0_30] : memref<128x256xf32, #tpu.memory_space<vmem>>, vector<128x256xf32>
    %36 = arith.addf %34, %35 : vector<128x256xf32>
    %cst_31 = arith.constant 0.000000e+00 : f32
    %37 = vector.broadcast %cst_31 : f32 to vector<128x256xf32>
    %38 = arith.maximumf %36, %37 : vector<128x256xf32>
    %c0_32 = arith.constant 0 : index
    %c0_33 = arith.constant 0 : index
    %39 = vector.load %arg11[%c0_32, %c0_33] : memref<8x128xbf16, #tpu.memory_space<vmem>>, vector<8x128xbf16>
    %40 = arith.truncf %38 : vector<128x256xf32> to vector<128x256xbf16>
    %cst_34 = arith.constant dense<0.000000e+00> : vector<8x256xf32>
    %41 = tpu.matmul %39, %40, %cst_34 {dimension_numbers = #tpu.dot_dimension_numbers<[1], [0], [0], [1], [0, 0, 1, 1], [], []>} : vector<8x128xbf16>, vector<128x256xbf16>, vector<8x256xf32> -> vector<8x256xf32>
    %c0_35 = arith.constant 0 : index
    %c0_36 = arith.constant 0 : index
    %42 = vector.load %arg12[%c0_35, %c0_36] : memref<8x256xf32, #tpu.memory_space<vmem>>, vector<8x256xf32>
    %43 = arith.addf %41, %42 : vector<8x256xf32>
    %44 = math.tanh %43 : vector<8x256xf32>
    %c0_37 = arith.constant 0 : index
    %c0_38 = arith.constant 0 : index
    %45 = vector.load %arg13[%c0_37, %c0_38] : memref<8x256xf32, #tpu.memory_space<vmem>>, vector<8x256xf32>
    %46 = arith.addf %45, %44 : vector<8x256xf32>
    %c0_39 = arith.constant 0 : index
    %c0_40 = arith.constant 0 : index
    %47 = vector.load %arg14[%c0_39, %c0_40] : memref<8x256xf32, #tpu.memory_space<vmem>>, vector<8x256xf32>
    tpu.vector_store %arg14[%c0_39, %c0_40], %46 {strides = array<i32>} : memref<8x256xf32, #tpu.memory_space<vmem>>, vector<8x256xf32>,
    return
  }
  func.func @transform_0(%arg0: i32) -> (i32, i32, i32) {
    %c0_i32 = arith.constant 0 : i32
    %c0_i32_0 = arith.constant 0 : i32
    %c0_i32_1 = arith.constant 0 : i32
    %c0_i32_2 = arith.constant 0 : i32
    return %c0_i32, %c0_i32_0, %c0_i32_1 : i32, i32, i32
  }
  func.func @transform_1(%arg0: i32) -> (i32, i32) {
    %c0_i32 = arith.constant 0 : i32
    %c0_i32_0 = arith.constant 0 : i32
    %c0_i32_1 = arith.constant 0 : i32
    return %c0_i32, %c0_i32_0 : i32, i32
  }
  func.func @transform_2(%arg0: i32) -> (i32, i32) {
    %c0_i32 = arith.constant 0 : i32
    %c0_i32_0 = arith.constant 0 : i32
    %c0_i32_1 = arith.constant 0 : i32
    return %c0_i32, %c0_i32_0 : i32, i32
  }
  func.func @transform_3(%arg0: i32) -> (i32, i32) {
    %c0_i32 = arith.constant 0 : i32
    %c0_i32_0 = arith.constant 0 : i32
    %c0_i32_1 = arith.constant 0 : i32
    return %c0_i32, %c0_i32_0 : i32, i32
  }
  func.func @transform_4(%arg0: i32) -> (i32, i32) {
    %c0_i32 = arith.constant 0 : i32
    %c0_i32_0 = arith.constant 0 : i32
    %c0_i32_1 = arith.constant 0 : i32
    return %c0_i32, %c0_i32_0 : i32, i32
  }
  func.func @transform_5(%arg0: i32) -> (i32, i32) {
    %c0_i32 = arith.constant 0 : i32
    %c0_i32_0 = arith.constant 0 : i32
    %c0_i32_1 = arith.constant 0 : i32
    return %c0_i32, %c0_i32_0 : i32, i32
  }
  func.func @transform_6(%arg0: i32) -> (i32, i32) {
    %c0_i32 = arith.constant 0 : i32
    %c0_i32_0 = arith.constant 0 : i32
    %c0_i32_1 = arith.constant 0 : i32
    return %c0_i32, %c0_i32_0 : i32, i32
  }
  func.func @transform_7(%arg0: i32) -> (i32, i32) {
    %c0_i32 = arith.constant 0 : i32
    %c0_i32_0 = arith.constant 0 : i32
    %c0_i32_1 = arith.constant 0 : i32
    return %c0_i32, %c0_i32_0 : i32, i32
  }
  func.func @transform_8(%arg0: i32) -> (i32, i32) {
    %c0_i32 = arith.constant 0 : i32
    %c0_i32_0 = arith.constant 0 : i32
    %c0_i32_1 = arith.constant 0 : i32
    return %c0_i32, %c0_i32_0 : i32, i32
  }
  func.func @transform_9(%arg0: i32) -> (i32, i32) {
    %c0_i32 = arith.constant 0 : i32
    %c0_i32_0 = arith.constant 0 : i32
    %c0_i32_1 = arith.constant 0 : i32
    return %c0_i32, %c0_i32_0 : i32, i32
  }
  func.func @transform_10(%arg0: i32) -> (i32, i32) {
    %c0_i32 = arith.constant 0 : i32
    %c0_i32_0 = arith.constant 0 : i32
    %c0_i32_1 = arith.constant 0 : i32
    return %c0_i32, %c0_i32_0 : i32, i32
  }
  func.func @transform_11(%arg0: i32) -> (i32, i32) {
    %c0_i32 = arith.constant 0 : i32
    %c0_i32_0 = arith.constant 0 : i32
    %c0_i32_1 = arith.constant 0 : i32
    return %c0_i32, %c0_i32_0 : i32, i32
  }
  func.func @transform_12(%arg0: i32) -> (i32, i32) {
    %c0_i32 = arith.constant 0 : i32
    %c0_i32_0 = arith.constant 0 : i32
    %c0_i32_1 = arith.constant 0 : i32
    return %c0_i32, %c0_i32_0 : i32, i32
  }
  func.func @transform_13(%arg0: i32) -> (i32, i32) {
    %c0_i32 = arith.constant 0 : i32
    %c0_i32_0 = arith.constant 0 : i32
    %c0_i32_1 = arith.constant 0 : i32
    return %c0_i32, %c0_i32_0 : i32, i32
  }
}

</mosaic_0001>

<llo_original>
// kernel: decoder.1
$region0: #{decoder.1}
  #allocation0 [shape = 'u32[]', space=smem, size = 0x4, offset = 0x4, fixed_abs, tag = 'smem constant byte address 0x4 - core index']
  #allocation1 [shape = 'u32[144,128]{1,0:T(1,128)}', space=vmem, size = 0x12000, scoped, tag = 'internal scratch']
  %s0 = inlined_call_operand.vmem [shape: bf16[2,128,64], index: 0, kind: input, shape index: {}]
  %s1 = inlined_call_operand.hbm [shape: bf16[64,128], index: 1, kind: input, shape index: {}]
  %s2 = inlined_call_operand.hbm [shape: bf16[128,128], index: 2, kind: input, shape index: {}]
  %s3 = inlined_call_operand.vmem [shape: f32[128,1], index: 3, kind: input, shape index: {}]
  %s4 = inlined_call_operand.hbm [shape: bf16[128,128], index: 4, kind: input, shape index: {}]
  %s5 = inlined_call_operand.hbm [shape: f32[128,256], index: 5, kind: input, shape index: {}]
  %s6 = inlined_call_operand.hbm [shape: bf16[128,128], index: 6, kind: input, shape index: {}]
  %s7 = inlined_call_operand.hbm [shape: f32[128,256], index: 7, kind: input, shape index: {}]
  %s8 = inlined_call_operand.hbm [shape: bf16[128,128], index: 8, kind: input, shape index: {}]
  %s9 = inlined_call_operand.vmem [shape: f32[128,256], index: 9, kind: input, shape index: {}]
  %s10 = inlined_call_operand.hbm [shape: bf16[8,128], index: 10, kind: input, shape index: {}]
  %s11 = inlined_call_operand.hbm [shape: f32[8,256], index: 11, kind: input, shape index: {}]
  %s12 = inlined_call_operand.vmem [shape: f32[8,256], index: 12, kind: input, shape index: {}]
  %s13 = inlined_call_operand.vmem [shape: f32[8,256], index: 13, kind: output, shape index: {}]
  %s14 = sld [smem:[#allocation0]]
  $region98: #{decoder.1} parent=0
    _
  %s16 = ssub.s32 1, %s14
  %s17 = scalar_select 0, %s16, %s14
  $region1: #{decoder.1} parent=0
    #allocation2 [shape = 'u8[16384]{0}', space=vmem, size = 0x4000, scoped, tag = 'input window, operand 1, single buffered']
    #allocation3 [shape = 's32[1]{0}', space=sflag, size = 0x4, scoped, tag = 'scoped memory for decoder.1']
    #allocation4 [shape = 'u8[32768]{0}', space=vmem, size = 0x8000, scoped, tag = 'input window, operand 2, single buffered']
    #allocation5 [shape = 's32[1]{0}', space=sflag, size = 0x4, scoped, tag = 'scoped memory for decoder.1']
    #allocation6 [shape = 'u8[32768]{0}', space=vmem, size = 0x8000, scoped, tag = 'input window, operand 4, single buffered']
    #allocation7 [shape = 'u8[131072]{0}', space=vmem, size = 0x20000, scoped, tag = 'input window, operand 5, single buffered']
    #allocation8 [shape = 's32[1]{0}', space=sflag, size = 0x4, scoped, tag = 'scoped memory for decoder.1']
    #allocation9 [shape = 'u8[32768]{0}', space=vmem, size = 0x8000, scoped, tag = 'input window, operand 6, single buffered']
    #allocation10 [shape = 'u8[131072]{0}', space=vmem, size = 0x20000, scoped, tag = 'input window, operand 7, single buffered']
    #allocation11 [shape = 's32[1]{0}', space=sflag, size = 0x4, scoped, tag = 'scoped memory for decoder.1']
    #allocation12 [shape = 'u8[32768]{0}', space=vmem, size = 0x8000, scoped, tag = 'input window, operand 8, single buffered']
    #allocation13 [shape = 'u8[2048]{0}', space=vmem, size = 0x800, scoped, tag = 'input window, operand 10, single buffered']
    #allocation14 [shape = 's32[1]{0}', space=sflag, size = 0x4, scoped, tag = 'scoped memory for decoder.1']
    #allocation15 [shape = 'u8[8192]{0}', space=vmem, size = 0x2000, scoped, tag = 'input window, operand 11, single buffered']
    %18 = vsyncpa [#allocation3], 0
    %19 = vsyncpa [#allocation5], 0
    %20 = vsyncpa [#allocation8], 0
    %21 = vsyncpa [#allocation11], 0
    %22 = vsyncpa [#allocation14], 0
    // Predicated region
    $region2: #{decoder.1} parent=1 // pred_check
      _
    $region3: #{decoder.1} parent=1 // pred_check_branch
      %24 = sbr.rel (0) target = $region5
    $region4: #{decoder.1} parent=1 // pred_region
      _
    $region5: #{decoder.1} parent=1 // pred_fallthru
      _
    // Predicated region
    $region6: #{decoder.1} parent=1 // pred_check
      _
    $region7: #{decoder.1} parent=1 // pred_check_branch
      %26 = sbr.rel (0) target = $region9
    $region8: #{decoder.1} parent=1 // pred_region
      %s28 = ssub.s32 512, 512
      %29 = vsyncadd [#allocation3], %s28
      %s30 = sshll.u32 [#allocation2], 4
      %s31 = int_to_ptr.vmem [resolvable:$true] %s30
      %36 = dma.hbm_to_vmem [thread:$0]  %s1, 512, %s31, [#allocation3], 64, 64, 4
    $region9: #{decoder.1} parent=1 // pred_fallthru
      _
    // Predicated region
    $region10: #{decoder.1} parent=1 // pred_check
      _
    $region11: #{decoder.1} parent=1 // pred_check_branch
      %38 = sbr.rel (0) target = $region13
    $region12: #{decoder.1} parent=1 // pred_region
      %s40 = ssub.s32 1024, 1024
      %41 = vsyncadd [#allocation5], %s40
      %s42 = sshll.u32 [#allocation4], 4
      %s43 = int_to_ptr.vmem [resolvable:$true] %s42
      %48 = dma.hbm_to_vmem [thread:$0]  %s2, 1024, %s43, [#allocation5], 64, 64, 4
    $region13: #{decoder.1} parent=1 // pred_fallthru
      _
    // Predicated region
    $region14: #{decoder.1} parent=1 // pred_check
      _
    $region15: #{decoder.1} parent=1 // pred_check_branch
      %50 = sbr.rel (0) target = $region17
    $region16: #{decoder.1} parent=1 // pred_region
      _
    $region17: #{decoder.1} parent=1 // pred_fallthru
      _
    // Predicated region
    $region18: #{decoder.1} parent=1 // pred_check
      _
    $region19: #{decoder.1} parent=1 // pred_check_branch
      %52 = sbr.rel (0) target = $region21
    $region20: #{decoder.1} parent=1 // pred_region
      %s54 = ssub.s32 1024, 1024
      %55 = vsyncadd [#allocation5], %s54
      %s56 = sshll.u32 [#allocation6], 4
      %s57 = int_to_ptr.vmem [resolvable:$true] %s56
      %62 = dma.hbm_to_vmem [thread:$0]  %s4, 1024, %s57, [#allocation5], 64, 64, 4
    $region21: #{decoder.1} parent=1 // pred_fallthru
      _
    // Predicated region
    $region22: #{decoder.1} parent=1 // pred_check
      _
    $region23: #{decoder.1} parent=1 // pred_check_branch
      %64 = sbr.rel (0) target = $region25
    $region24: #{decoder.1} parent=1 // pred_region
      %s66 = ssub.s32 4096, 4096
      %67 = vsyncadd [#allocation8], %s66
      %s68 = sshll.u32 [#allocation7], 4
      %s69 = int_to_ptr.vmem [resolvable:$true] %s68
      %74 = dma.hbm_to_vmem [thread:$0]  %s5, 4096, %s69, [#allocation8], 256, 256, 16
    $region25: #{decoder.1} parent=1 // pred_fallthru
      _
    // Predicated region
    $region26: #{decoder.1} parent=1 // pred_check
      _
    $region27: #{decoder.1} parent=1 // pred_check_branch
      %76 = sbr.rel (0) target = $region29
    $region28: #{decoder.1} parent=1 // pred_region
      %s78 = ssub.s32 1024, 1024
      %79 = vsyncadd [#allocation8], %s78
      %s80 = sshll.u32 [#allocation9], 4
      %s81 = int_to_ptr.vmem [resolvable:$true] %s80
      %86 = dma.hbm_to_vmem [thread:$0]  %s6, 1024, %s81, [#allocation8], 64, 64, 4
    $region29: #{decoder.1} parent=1 // pred_fallthru
      _
    // Predicated region
    $region30: #{decoder.1} parent=1 // pred_check
      _
    $region31: #{decoder.1} parent=1 // pred_check_branch
      %88 = sbr.rel (0) target = $region33
    $region32: #{decoder.1} parent=1 // pred_region
      %s90 = ssub.s32 4096, 4096
      %91 = vsyncadd [#allocation11], %s90
      %s92 = sshll.u32 [#allocation10], 4
      %s93 = int_to_ptr.vmem [resolvable:$true] %s92
      %98 = dma.hbm_to_vmem [thread:$0]  %s7, 4096, %s93, [#allocation11], 256, 256, 16
    $region33: #{decoder.1} parent=1 // pred_fallthru
      _
    // Predicated region
    $region34: #{decoder.1} parent=1 // pred_check
      _
    $region35: #{decoder.1} parent=1 // pred_check_branch
      %100 = sbr.rel (0) target = $region37
    $region36: #{decoder.1} parent=1 // pred_region
      %s102 = ssub.s32 1024, 1024
      %103 = vsyncadd [#allocation11], %s102
      %s104 = sshll.u32 [#allocation12], 4
      %s105 = int_to_ptr.vmem [resolvable:$true] %s104
      %110 = dma.hbm_to_vmem [thread:$0]  %s8, 1024, %s105, [#allocation11], 64, 64, 4
    $region37: #{decoder.1} parent=1 // pred_fallthru
      _
    // Predicated region
    $region38: #{decoder.1} parent=1 // pred_check
      _
    $region39: #{decoder.1} parent=1 // pred_check_branch
      %112 = sbr.rel (0) target = $region41
    $region40: #{decoder.1} parent=1 // pred_region
      _
    $region41: #{decoder.1} parent=1 // pred_fallthru
      _
    // Predicated region
    $region42: #{decoder.1} parent=1 // pred_check
      _
    $region43: #{decoder.1} parent=1 // pred_check_branch
      %114 = sbr.rel (0) target = $region45
    $region44: #{decoder.1} parent=1 // pred_region
      %s116 = ssub.s32 64, 64
      %117 = vsyncadd [#allocation14], %s116
      %s119 = sshll.u32 [#allocation13], 4
      %s120 = int_to_ptr.vmem [resolvable:$true] %s119
      %122 = dma.hbm_to_vmem [thread:$0]  %s10, 64, %s120, [#allocation14]
    $region45: #{decoder.1} parent=1 // pred_fallthru
      _
    // Predicated region
    $region46: #{decoder.1} parent=1 // pred_check
      _
    $region47: #{decoder.1} parent=1 // pred_check_branch
      %124 = sbr.rel (0) target = $region49
    $region48: #{decoder.1} parent=1 // pred_region
      %s126 = ssub.s32 256, 256
      %127 = vsyncadd [#allocation14], %s126
      %s129 = sshll.u32 [#allocation15], 4
      %s130 = int_to_ptr.vmem [resolvable:$true] %s129
      %132 = dma.hbm_to_vmem [thread:$0]  %s11, 256, %s130, [#allocation14]
    $region49: #{decoder.1} parent=1 // pred_fallthru
      _
    // Predicated region
    $region50: #{decoder.1} parent=1 // pred_check
      _
    $region51: #{decoder.1} parent=1 // pred_check_branch
      %134 = sbr.rel (0) target = $region53
    $region52: #{decoder.1} parent=1 // pred_region
      _
    $region53: #{decoder.1} parent=1 // pred_fallthru
      _
    // Predicated region
    $region54: #{decoder.1} parent=1 // pred_check
      _
    $region55: #{decoder.1} parent=1 // pred_check_branch
      %136 = sbr.rel (0) target = $region57
    $region56: #{decoder.1} parent=1 // pred_region
      %137 = dma.done [#allocation3], 512
    $region57: #{decoder.1} parent=1 // pred_fallthru
      _
    // Predicated region
    $region58: #{decoder.1} parent=1 // pred_check
      _
    $region59: #{decoder.1} parent=1 // pred_check_branch
      %139 = sbr.rel (0) target = $region61
    $region60: #{decoder.1} parent=1 // pred_region
      %140 = dma.done [#allocation5], 1024
    $region61: #{decoder.1} parent=1 // pred_fallthru
      _
    // Predicated region
    $region62: #{decoder.1} parent=1 // pred_check
      _
    $region63: #{decoder.1} parent=1 // pred_check_branch
      %142 = sbr.rel (0) target = $region65
    $region64: #{decoder.1} parent=1 // pred_region
      %143 = dma.done [#allocation5], 1024
    $region65: #{decoder.1} parent=1 // pred_fallthru
      _
    // Predicated region
    $region66: #{decoder.1} parent=1 // pred_check
      _
    $region67: #{decoder.1} parent=1 // pred_check_branch
      %145 = sbr.rel (0) target = $region69
    $region68: #{decoder.1} parent=1 // pred_region
      %146 = dma.done [#allocation8], 4096
    $region69: #{decoder.1} parent=1 // pred_fallthru
      _
    // Predicated region
    $region70: #{decoder.1} parent=1 // pred_check
      _
    $region71: #{decoder.1} parent=1 // pred_check_branch
      %148 = sbr.rel (0) target = $region73
    $region72: #{decoder.1} parent=1 // pred_region
      %149 = dma.done [#allocation8], 1024
    $region73: #{decoder.1} parent=1 // pred_fallthru
      _
    // Predicated region
    $region74: #{decoder.1} parent=1 // pred_check
      _
    $region75: #{decoder.1} parent=1 // pred_check_branch
      %151 = sbr.rel (0) target = $region77
    $region76: #{decoder.1} parent=1 // pred_region
      %152 = dma.done [#allocation11], 4096
    $region77: #{decoder.1} parent=1 // pred_fallthru
      _
    // Predicated region
    $region78: #{decoder.1} parent=1 // pred_check
      _
    $region79: #{decoder.1} parent=1 // pred_check_branch
      %154 = sbr.rel (0) target = $region81
    $region80: #{decoder.1} parent=1 // pred_region
      %155 = dma.done [#allocation11], 1024
    $region81: #{decoder.1} parent=1 // pred_fallthru
      _
    // Predicated region
    $region82: #{decoder.1} parent=1 // pred_check
      _
    $region83: #{decoder.1} parent=1 // pred_check_branch
      %157 = sbr.rel (0) target = $region85
    $region84: #{decoder.1} parent=1 // pred_region
      %158 = dma.done [#allocation14], 64
    $region85: #{decoder.1} parent=1 // pred_fallthru
      _
    // Predicated region
    $region86: #{decoder.1} parent=1 // pred_check
      _
    $region87: #{decoder.1} parent=1 // pred_check_branch
      %160 = sbr.rel (0) target = $region89
    $region88: #{decoder.1} parent=1 // pred_region
      %161 = dma.done [#allocation14], 256
    $region89: #{decoder.1} parent=1 // pred_fallthru
      _
    %v163 = vld [vmem:[#allocation2] sm:$0xf]
    %v164 = vld [vmem:[#allocation2 + $0x4] sm:$0xf]
    %v165 = vld [vmem:[#allocation2 + $0x8] sm:$0xf]
    %v166 = vld [vmem:[#allocation2 + $0xc] sm:$0xf]
    %v167 = vld [vmem:[#allocation2 + $0x10] sm:$0xf]
    %v168 = vld [vmem:[#allocation2 + $0x14] sm:$0xf]
    %v169 = vld [vmem:[#allocation2 + $0x18] sm:$0xf]
    %v170 = vld [vmem:[#allocation2 + $0x1c] sm:$0xf]
    %v171 = vld [vmem:[#allocation4] sm:$0xf]
    %v172 = vld [vmem:[#allocation4 + $0x4] sm:$0xf]
    %v173 = vld [vmem:[#allocation4 + $0x8] sm:$0xf]
    %v174 = vld [vmem:[#allocation4 + $0xc] sm:$0xf]
    %v175 = vld [vmem:[#allocation4 + $0x10] sm:$0xf]
    %v176 = vld [vmem:[#allocation4 + $0x14] sm:$0xf]
    %v177 = vld [vmem:[#allocation4 + $0x18] sm:$0xf]
    %v178 = vld [vmem:[#allocation4 + $0x1c] sm:$0xf]
    %v179 = vld [vmem:[#allocation4 + $0x20] sm:$0xf]
    %v180 = vld [vmem:[#allocation4 + $0x24] sm:$0xf]
    %v181 = vld [vmem:[#allocation4 + $0x28] sm:$0xf]
    %v182 = vld [vmem:[#allocation4 + $0x2c] sm:$0xf]
    %v183 = vld [vmem:[#allocation4 + $0x30] sm:$0xf]
    %v184 = vld [vmem:[#allocation4 + $0x34] sm:$0xf]
    %v185 = vld [vmem:[#allocation4 + $0x38] sm:$0xf]
    %v186 = vld [vmem:[#allocation4 + $0x3c] sm:$0xf]
    %v187 = vld [vmem:[%s0] sm:$0xf]
    %v188 = vld [vmem:[%s0 + $0x4] sm:$0xf]
    %v189 = vld [vmem:[%s0 + $0x8] sm:$0xf]
    %v190 = vld [vmem:[%s0 + $0xc] sm:$0xf]
    %v191 = vld [vmem:[%s0 + $0x10] sm:$0xf]
    %v192 = vld [vmem:[%s0 + $0x14] sm:$0xf]
    %v193 = vld [vmem:[%s0 + $0x18] sm:$0xf]
    %v194 = vld [vmem:[%s0 + $0x1c] sm:$0xf]
    %v195 = vld [vmem:[%s0 + $0x20] sm:$0xf]
    %v196 = vld [vmem:[%s0 + $0x24] sm:$0xf]
    %v197 = vld [vmem:[%s0 + $0x28] sm:$0xf]
    %v198 = vld [vmem:[%s0 + $0x2c] sm:$0xf]
    %v199 = vld [vmem:[%s0 + $0x30] sm:$0xf]
    %v200 = vld [vmem:[%s0 + $0x34] sm:$0xf]
    %v201 = vld [vmem:[%s0 + $0x38] sm:$0xf]
    %v202 = vld [vmem:[%s0 + $0x3c] sm:$0xf]
    %v219 = vunpack.c.l.b16 %v171
    %v220 = vunpack.c.l.b16 %v172
    %v221 = vunpack.c.l.b16 %v173
    %v222 = vunpack.c.l.b16 %v174
    %v223 = vunpack.c.l.b16 %v175
    %v224 = vunpack.c.l.b16 %v176
    %v225 = vunpack.c.l.b16 %v177
    %v226 = vunpack.c.l.b16 %v178
    %v227 = vunpack.c.l.b16 %v179
    %v228 = vunpack.c.l.b16 %v180
    %v229 = vunpack.c.l.b16 %v181
    %v230 = vunpack.c.l.b16 %v182
    %v231 = vunpack.c.l.b16 %v183
    %v232 = vunpack.c.l.b16 %v184
    %v233 = vunpack.c.l.b16 %v185
    %v234 = vunpack.c.l.b16 %v186
    %v235 = vpack.c.b16 %v220, %v219
    %v236 = vpack.c.b16 %v222, %v221
    %v237 = vpack.c.b16 %v224, %v223
    %v238 = vpack.c.b16 %v226, %v225
    %v239 = vpack.c.b16 %v228, %v227
    %v240 = vpack.c.b16 %v230, %v229
    %v241 = vpack.c.b16 %v232, %v231
    %v242 = vpack.c.b16 %v234, %v233
    %v267 = vunpack.c.l.b16 %v187
    %v268 = vunpack.c.l.b16 %v188
    %v269 = vunpack.c.l.b16 %v189
    %v270 = vunpack.c.l.b16 %v190
    %v271 = vunpack.c.l.b16 %v191
    %v272 = vunpack.c.l.b16 %v192
    %v273 = vunpack.c.l.b16 %v193
    %v274 = vunpack.c.l.b16 %v194
    %v275 = vunpack.c.l.b16 %v195
    %v276 = vunpack.c.l.b16 %v196
    %v277 = vunpack.c.l.b16 %v197
    %v278 = vunpack.c.l.b16 %v198
    %v279 = vunpack.c.l.b16 %v199
    %v280 = vunpack.c.l.b16 %v200
    %v281 = vunpack.c.l.b16 %v201
    %v282 = vunpack.c.l.b16 %v202
    %v283 = vpack.c.b16 %v268, %v267
    %v284 = vpack.c.b16 %v270, %v269
    %v285 = vpack.c.b16 %v272, %v271
    %v286 = vpack.c.b16 %v274, %v273
    %v287 = vpack.c.b16 %v276, %v275
    %v288 = vpack.c.b16 %v278, %v277
    %v289 = vpack.c.b16 %v280, %v279
    %v290 = vpack.c.b16 %v282, %v281
    %299 = vmatprep.subr.bf16.mxu0 0
    %300 = vmatpush1.bf16.msra.mxu0 %v290
    %301 = vmatprep.subr.bf16.mxu0 0
    %302 = vmatpush1.bf16.msra.mxu0 %v289
    %303 = vmatprep.subr.bf16.mxu0 0
    %304 = vmatpush1.bf16.msra.mxu0 %v288
    %305 = vmatprep.subr.bf16.mxu0 0
    %306 = vmatpush1.bf16.msra.mxu0 %v287
    %307 = vmatprep.subr.bf16.mxu0 0
    %308 = vmatpush1.bf16.msra.mxu0 %v286
    %309 = vmatprep.subr.bf16.mxu0 0
    %310 = vmatpush1.bf16.msra.mxu0 %v285
    %311 = vmatprep.subr.bf16.mxu0 0
    %312 = vmatpush1.bf16.msra.mxu0 %v284
    %313 = vmatprep.subr.bf16.mxu0 0
    %314 = vmatpush1.bf16.msra.mxu0 %v283
    %315 = vmatprep.subr.bf16.mxu0 0
    %316 = vmatpush2.bf16.msra.mxu0 0
    %317 = vmatprep.subr.bf16.mxu0 0
    %318 = vmatpush2.bf16.msra.mxu0 0
    %319 = vmatprep.subr.bf16.mxu0 0
    %320 = vmatpush2.bf16.msra.mxu0 0
    %321 = vmatprep.subr.bf16.mxu0 0
    %322 = vmatpush2.bf16.msra.mxu0 0
    %323 = vmatprep.subr.bf16.mxu0 0
    %324 = vmatpush2.bf16.msra.mxu0 0
    %325 = vmatprep.subr.bf16.mxu0 0
    %326 = vmatpush2.bf16.msra.mxu0 0
    %327 = vmatprep.subr.bf16.mxu0 0
    %328 = vmatpush2.bf16.msra.mxu0 0
    %329 = vmatprep.subr.bf16.mxu0 0
    %330 = vmatpush2.bf16.msra.mxu0 0
    %331 = vmatprep.mubr.bf16.mxu0 0
    %332 = vmatmul.mubr.bf16.gmra.mxu0 %v235
    %v333 = vpop.f32.mrf.mxu0
    %v334 = vadd.f32 0.0, %v333
    %v335 = vpop.f32.mrf.mxu0
    %v336 = vpop.f32.mrf.mxu0
    %v337 = vadd.f32 0.0, %v336
    %v338 = vpop.f32.mrf.mxu0
    %339 = vmatprep.mubr.bf16.mxu0 0
    %340 = vmatmul.mubr.bf16.gmra.mxu0 %v236
    %v341 = vpop.f32.mrf.mxu0
    %v342 = vadd.f32 0.0, %v341
    %v343 = vpop.f32.mrf.mxu0
    %v344 = vpop.f32.mrf.mxu0
    %v345 = vadd.f32 0.0, %v344
    %v346 = vpop.f32.mrf.mxu0
    %347 = vmatprep.mubr.bf16.mxu0 0
    %348 = vmatmul.mubr.bf16.gmra.mxu0 %v237
    %v349 = vpop.f32.mrf.mxu0
    %v350 = vadd.f32 0.0, %v349
    %v351 = vpop.f32.mrf.mxu0
    %v352 = vpop.f32.mrf.mxu0
    %v353 = vadd.f32 0.0, %v352
    %v354 = vpop.f32.mrf.mxu0
    %355 = vmatprep.mubr.bf16.mxu0 0
    %356 = vmatmul.mubr.bf16.gmra.mxu0 %v238
    %v357 = vpop.f32.mrf.mxu0
    %v358 = vadd.f32 0.0, %v357
    %v359 = vpop.f32.mrf.mxu0
    %v360 = vpop.f32.mrf.mxu0
    %v361 = vadd.f32 0.0, %v360
    %v362 = vpop.f32.mrf.mxu0
    %363 = vmatprep.mubr.bf16.mxu0 0
    %364 = vmatmul.mubr.bf16.gmra.mxu0 %v239
    %v365 = vpop.f32.mrf.mxu0
    %v366 = vadd.f32 0.0, %v365
    %v367 = vpop.f32.mrf.mxu0
    %v368 = vpop.f32.mrf.mxu0
    %v369 = vadd.f32 0.0, %v368
    %v370 = vpop.f32.mrf.mxu0
    %371 = vmatprep.mubr.bf16.mxu0 0
    %372 = vmatmul.mubr.bf16.gmra.mxu0 %v240
    %v373 = vpop.f32.mrf.mxu0
    %v374 = vadd.f32 0.0, %v373
    %v375 = vpop.f32.mrf.mxu0
    %v376 = vpop.f32.mrf.mxu0
    %v377 = vadd.f32 0.0, %v376
    %v378 = vpop.f32.mrf.mxu0
    %379 = vmatprep.mubr.bf16.mxu0 0
    %380 = vmatmul.mubr.bf16.gmra.mxu0 %v241
    %v381 = vpop.f32.mrf.mxu0
    %v382 = vadd.f32 0.0, %v381
    %v383 = vpop.f32.mrf.mxu0
    %v384 = vpop.f32.mrf.mxu0
    %v385 = vadd.f32 0.0, %v384
    %v386 = vpop.f32.mrf.mxu0
    %387 = vmatprep.mubr.bf16.mxu0 0
    %388 = vmatmul.mubr.bf16.gmra.mxu0 %v242
    %v389 = vpop.f32.mrf.mxu0
    %v390 = vadd.f32 0.0, %v389
    %v391 = vpop.f32.mrf.mxu0
    %v392 = vpop.f32.mrf.mxu0
    %v393 = vadd.f32 0.0, %v392
    %v394 = vpop.f32.mrf.mxu0
    %395 = vdwg.mxu0
    %v396 = vpack.c.bf16 %v337, %v334
    %v397 = vpack.c.bf16 %v345, %v342
    %v398 = vpack.c.bf16 %v353, %v350
    %v399 = vpack.c.bf16 %v361, %v358
    %v400 = vpack.c.bf16 %v369, %v366
    %v401 = vpack.c.bf16 %v377, %v374
    %v402 = vpack.c.bf16 %v385, %v382
    %v403 = vpack.c.bf16 %v393, %v390
    %v412 = vunpack.c.l.b16 %v163
    %v413 = vunpack.c.l.b16 %v164
    %v414 = vunpack.c.l.b16 %v165
    %v415 = vunpack.c.l.b16 %v166
    %v416 = vunpack.c.l.b16 %v167
    %v417 = vunpack.c.l.b16 %v168
    %v418 = vunpack.c.l.b16 %v169
    %v419 = vunpack.c.l.b16 %v170
    %v420 = vpack.c.b16 %v413, %v412
    %v421 = vpack.c.b16 %v415, %v414
    %v422 = vpack.c.b16 %v417, %v416
    %v423 = vpack.c.b16 %v419, %v418
    %vm428 = vcmask 523264
    %v430 = vsel %vm428, %v396, 0
    %v433 = vsel %vm428, %v397, 0
    %v436 = vsel %vm428, %v398, 0
    %v439 = vsel %vm428, %v399, 0
    %v442 = vsel %vm428, %v400, 0
    %v445 = vsel %vm428, %v401, 0
    %v448 = vsel %vm428, %v402, 0
    %v451 = vsel %vm428, %v403, 0
    %453 = vmatprep.subr.bf16.mxu0 0
    %454 = vmatpush1.bf16.msra.mxu0 0
    %455 = vmatprep.subr.bf16.mxu0 0
    %456 = vmatpush1.bf16.msra.mxu0 0
    %457 = vmatprep.subr.bf16.mxu0 0
    %458 = vmatpush1.bf16.msra.mxu0 0
    %459 = vmatprep.subr.bf16.mxu0 0
    %460 = vmatpush1.bf16.msra.mxu0 0
    %461 = vmatprep.subr.bf16.mxu0 0
    %462 = vmatpush1.bf16.msra.mxu0 %v423
    %463 = vmatprep.subr.bf16.mxu0 0
    %464 = vmatpush1.bf16.msra.mxu0 %v422
    %465 = vmatprep.subr.bf16.mxu0 0
    %466 = vmatpush1.bf16.msra.mxu0 %v421
    %467 = vmatprep.subr.bf16.mxu0 0
    %468 = vmatpush1.bf16.msra.mxu0 %v420
    %469 = vmatprep.subr.bf16.mxu0 0
    %470 = vmatpush2.bf16.msra.mxu0 0
    %471 = vmatprep.subr.bf16.mxu0 0
    %472 = vmatpush2.bf16.msra.mxu0 0
    %473 = vmatprep.subr.bf16.mxu0 0
    %474 = vmatpush2.bf16.msra.mxu0 0
    %475 = vmatprep.subr.bf16.mxu0 0
    %476 = vmatpush2.bf16.msra.mxu0 0
    %477 = vmatprep.subr.bf16.mxu0 0
    %478 = vmatpush2.bf16.msra.mxu0 0
    %479 = vmatprep.subr.bf16.mxu0 0
    %480 = vmatpush2.bf16.msra.mxu0 0
    %481 = vmatprep.subr.bf16.mxu0 0
    %482 = vmatpush2.bf16.msra.mxu0 0
    %483 = vmatprep.subr.bf16.mxu0 0
    %484 = vmatpush2.bf16.msra.mxu0 0
    %485 = vmatprep.mubr.bf16.mxu0 0
    %486 = vmatmul.mubr.bf16.gmra.mxu0 %v430
    %v487 = vpop.f32.mrf.mxu0
    %v488 = vadd.f32 0.0, %v487
    %v489 = vpop.f32.mrf.mxu0
    %v490 = vpop.f32.mrf.mxu0
    %v491 = vadd.f32 0.0, %v490
    %v492 = vpop.f32.mrf.mxu0
    %493 = vmatprep.mubr.bf16.mxu0 0
    %494 = vmatmul.mubr.bf16.gmra.mxu0 %v433
    %v495 = vpop.f32.mrf.mxu0
    %v496 = vadd.f32 0.0, %v495
    %v497 = vpop.f32.mrf.mxu0
    %v498 = vpop.f32.mrf.mxu0
    %v499 = vadd.f32 0.0, %v498
    %v500 = vpop.f32.mrf.mxu0
    %501 = vmatprep.mubr.bf16.mxu0 0
    %502 = vmatmul.mubr.bf16.gmra.mxu0 %v436
    %v503 = vpop.f32.mrf.mxu0
    %v504 = vadd.f32 0.0, %v503
    %v505 = vpop.f32.mrf.mxu0
    %v506 = vpop.f32.mrf.mxu0
    %v507 = vadd.f32 0.0, %v506
    %v508 = vpop.f32.mrf.mxu0
    %509 = vmatprep.mubr.bf16.mxu0 0
    %510 = vmatmul.mubr.bf16.gmra.mxu0 %v439
    %v511 = vpop.f32.mrf.mxu0
    %v512 = vadd.f32 0.0, %v511
    %v513 = vpop.f32.mrf.mxu0
    %v514 = vpop.f32.mrf.mxu0
    %v515 = vadd.f32 0.0, %v514
    %v516 = vpop.f32.mrf.mxu0
    %517 = vmatprep.mubr.bf16.mxu0 0
    %518 = vmatmul.mubr.bf16.gmra.mxu0 %v442
    %v519 = vpop.f32.mrf.mxu0
    %v520 = vadd.f32 0.0, %v519
    %v521 = vpop.f32.mrf.mxu0
    %v522 = vpop.f32.mrf.mxu0
    %v523 = vadd.f32 0.0, %v522
    %v524 = vpop.f32.mrf.mxu0
    %525 = vmatprep.mubr.bf16.mxu0 0
    %526 = vmatmul.mubr.bf16.gmra.mxu0 %v445
    %v527 = vpop.f32.mrf.mxu0
    %v528 = vadd.f32 0.0, %v527
    %v529 = vpop.f32.mrf.mxu0
    %v530 = vpop.f32.mrf.mxu0
    %v531 = vadd.f32 0.0, %v530
    %v532 = vpop.f32.mrf.mxu0
    %533 = vmatprep.mubr.bf16.mxu0 0
    %534 = vmatmul.mubr.bf16.gmra.mxu0 %v448
    %v535 = vpop.f32.mrf.mxu0
    %v536 = vadd.f32 0.0, %v535
    %v537 = vpop.f32.mrf.mxu0
    %v538 = vpop.f32.mrf.mxu0
    %v539 = vadd.f32 0.0, %v538
    %v540 = vpop.f32.mrf.mxu0
    %541 = vmatprep.mubr.bf16.mxu0 0
    %542 = vmatmul.mubr.bf16.gmra.mxu0 %v451
    %v543 = vpop.f32.mrf.mxu0
    %v544 = vadd.f32 0.0, %v543
    %v545 = vpop.f32.mrf.mxu0
    %v546 = vpop.f32.mrf.mxu0
    %v547 = vadd.f32 0.0, %v546
    %v548 = vpop.f32.mrf.mxu0
    %549 = vdwg.mxu0
    %s550 = scalar_lea.vmem %s0, 64
    %v551 = vld [vmem:[%s550] sm:$0xf]
    %v552 = vld [vmem:[%s550 + $0x4] sm:$0xf]
    %v553 = vld [vmem:[%s550 + $0x8] sm:$0xf]
    %v554 = vld [vmem:[%s550 + $0xc] sm:$0xf]
    %v555 = vld [vmem:[%s550 + $0x10] sm:$0xf]
    %v556 = vld [vmem:[%s550 + $0x14] sm:$0xf]
    %v557 = vld [vmem:[%s550 + $0x18] sm:$0xf]
    %v558 = vld [vmem:[%s550 + $0x1c] sm:$0xf]
    %v559 = vld [vmem:[%s550 + $0x20] sm:$0xf]
    %v560 = vld [vmem:[%s550 + $0x24] sm:$0xf]
    %v561 = vld [vmem:[%s550 + $0x28] sm:$0xf]
    %v562 = vld [vmem:[%s550 + $0x2c] sm:$0xf]
    %v563 = vld [vmem:[%s550 + $0x30] sm:$0xf]
    %v564 = vld [vmem:[%s550 + $0x34] sm:$0xf]
    %v565 = vld [vmem:[%s550 + $0x38] sm:$0xf]
    %v566 = vld [vmem:[%s550 + $0x3c] sm:$0xf]
    %v583 = vunpack.c.l.b16 %v551
    %v584 = vunpack.c.l.b16 %v552
    %v585 = vunpack.c.l.b16 %v553
    %v586 = vunpack.c.l.b16 %v554
    %v587 = vunpack.c.l.b16 %v555
    %v588 = vunpack.c.l.b16 %v556
    %v589 = vunpack.c.l.b16 %v557
    %v590 = vunpack.c.l.b16 %v558
    %v591 = vunpack.c.l.b16 %v559
    %v592 = vunpack.c.l.b16 %v560
    %v593 = vunpack.c.l.b16 %v561
    %v594 = vunpack.c.l.b16 %v562
    %v595 = vunpack.c.l.b16 %v563
    %v596 = vunpack.c.l.b16 %v564
    %v597 = vunpack.c.l.b16 %v565
    %v598 = vunpack.c.l.b16 %v566
    %v599 = vpack.c.b16 %v584, %v583
    %v600 = vpack.c.b16 %v586, %v585
    %v601 = vpack.c.b16 %v588, %v587
    %v602 = vpack.c.b16 %v590, %v589
    %v603 = vpack.c.b16 %v592, %v591
    %v604 = vpack.c.b16 %v594, %v593
    %v605 = vpack.c.b16 %v596, %v595
    %v606 = vpack.c.b16 %v598, %v597
    %615 = vmatprep.subr.bf16.mxu0 0
    %616 = vmatpush1.bf16.msra.mxu0 %v606
    %617 = vmatprep.subr.bf16.mxu0 0
    %618 = vmatpush1.bf16.msra.mxu0 %v605
    %619 = vmatprep.subr.bf16.mxu0 0
    %620 = vmatpush1.bf16.msra.mxu0 %v604
    %621 = vmatprep.subr.bf16.mxu0 0
    %622 = vmatpush1.bf16.msra.mxu0 %v603
    %623 = vmatprep.subr.bf16.mxu0 0
    %624 = vmatpush1.bf16.msra.mxu0 %v602
    %625 = vmatprep.subr.bf16.mxu0 0
    %626 = vmatpush1.bf16.msra.mxu0 %v601
    %627 = vmatprep.subr.bf16.mxu0 0
    %628 = vmatpush1.bf16.msra.mxu0 %v600
    %629 = vmatprep.subr.bf16.mxu0 0
    %630 = vmatpush1.bf16.msra.mxu0 %v599
    %631 = vmatprep.subr.bf16.mxu0 0
    %632 = vmatpush2.bf16.msra.mxu0 0
    %633 = vmatprep.subr.bf16.mxu0 0
    %634 = vmatpush2.bf16.msra.mxu0 0
    %635 = vmatprep.subr.bf16.mxu0 0
    %636 = vmatpush2.bf16.msra.mxu0 0
    %637 = vmatprep.subr.bf16.mxu0 0
    %638 = vmatpush2.bf16.msra.mxu0 0
    %639 = vmatprep.subr.bf16.mxu0 0
    %640 = vmatpush2.bf16.msra.mxu0 0
    %641 = vmatprep.subr.bf16.mxu0 0
    %642 = vmatpush2.bf16.msra.mxu0 0
    %643 = vmatprep.subr.bf16.mxu0 0
    %644 = vmatpush2.bf16.msra.mxu0 0
    %645 = vmatprep.subr.bf16.mxu0 0
    %646 = vmatpush2.bf16.msra.mxu0 0
    %647 = vmatprep.mubr.bf16.mxu0 0
    %648 = vmatmul.mubr.bf16.gmra.mxu0 %v235
    %v649 = vpop.f32.mrf.mxu0
    %v650 = vadd.f32 0.0, %v649
    %v651 = vpop.f32.mrf.mxu0
    %v652 = vpop.f32.mrf.mxu0
    %v653 = vadd.f32 0.0, %v652
    %v654 = vpop.f32.mrf.mxu0
    %655 = vmatprep.mubr.bf16.mxu0 0
    %656 = vmatmul.mubr.bf16.gmra.mxu0 %v236
    %v657 = vpop.f32.mrf.mxu0
    %v658 = vadd.f32 0.0, %v657
    %v659 = vpop.f32.mrf.mxu0
    %v660 = vpop.f32.mrf.mxu0
    %v661 = vadd.f32 0.0, %v660
    %v662 = vpop.f32.mrf.mxu0
    %663 = vmatprep.mubr.bf16.mxu0 0
    %664 = vmatmul.mubr.bf16.gmra.mxu0 %v237
    %v665 = vpop.f32.mrf.mxu0
    %v666 = vadd.f32 0.0, %v665
    %v667 = vpop.f32.mrf.mxu0
    %v668 = vpop.f32.mrf.mxu0
    %v669 = vadd.f32 0.0, %v668
    %v670 = vpop.f32.mrf.mxu0
    %671 = vmatprep.mubr.bf16.mxu0 0
    %672 = vmatmul.mubr.bf16.gmra.mxu0 %v238
    %v673 = vpop.f32.mrf.mxu0
    %v674 = vadd.f32 0.0, %v673
    %v675 = vpop.f32.mrf.mxu0
    %v676 = vpop.f32.mrf.mxu0
    %v677 = vadd.f32 0.0, %v676
    %v678 = vpop.f32.mrf.mxu0
    %679 = vmatprep.mubr.bf16.mxu0 0
    %680 = vmatmul.mubr.bf16.gmra.mxu0 %v239
    %v681 = vpop.f32.mrf.mxu0
    %v682 = vadd.f32 0.0, %v681
    %v683 = vpop.f32.mrf.mxu0
    %v684 = vpop.f32.mrf.mxu0
    %v685 = vadd.f32 0.0, %v684
    %v686 = vpop.f32.mrf.mxu0
    %687 = vmatprep.mubr.bf16.mxu0 0
    %688 = vmatmul.mubr.bf16.gmra.mxu0 %v240
    %v689 = vpop.f32.mrf.mxu0
    %v690 = vadd.f32 0.0, %v689
    %v691 = vpop.f32.mrf.mxu0
    %v692 = vpop.f32.mrf.mxu0
    %v693 = vadd.f32 0.0, %v692
    %v694 = vpop.f32.mrf.mxu0
    %695 = vmatprep.mubr.bf16.mxu0 0
    %696 = vmatmul.mubr.bf16.gmra.mxu0 %v241
    %v697 = vpop.f32.mrf.mxu0
    %v698 = vadd.f32 0.0, %v697
    %v699 = vpop.f32.mrf.mxu0
    %v700 = vpop.f32.mrf.mxu0
    %v701 = vadd.f32 0.0, %v700
    %v702 = vpop.f32.mrf.mxu0
    %703 = vmatprep.mubr.bf16.mxu0 0
    %704 = vmatmul.mubr.bf16.gmra.mxu0 %v242
    %v705 = vpop.f32.mrf.mxu0
    %v706 = vadd.f32 0.0, %v705
    %v707 = vpop.f32.mrf.mxu0
    %v708 = vpop.f32.mrf.mxu0
    %v709 = vadd.f32 0.0, %v708
    %v710 = vpop.f32.mrf.mxu0
    %711 = vdwg.mxu0
    %v712 = vpack.c.bf16 %v653, %v650
    %v713 = vpack.c.bf16 %v661, %v658
    %v714 = vpack.c.bf16 %v669, %v666
    %v715 = vpack.c.bf16 %v677, %v674
    %v716 = vpack.c.bf16 %v685, %v682
    %v717 = vpack.c.bf16 %v693, %v690
    %v718 = vpack.c.bf16 %v701, %v698
    %v719 = vpack.c.bf16 %v709, %v706
    %v721 = vsel %vm428, %v712, 0
    %v724 = vsel %vm428, %v713, 0
    %v727 = vsel %vm428, %v714, 0
    %v730 = vsel %vm428, %v715, 0
    %v733 = vsel %vm428, %v716, 0
    %v736 = vsel %vm428, %v717, 0
    %v739 = vsel %vm428, %v718, 0
    %v742 = vsel %vm428, %v719, 0
    %744 = vmatprep.subr.bf16.mxu0 0
    %745 = vmatpush1.bf16.msra.mxu0 0
    %746 = vmatprep.subr.bf16.mxu0 0
    %747 = vmatpush1.bf16.msra.mxu0 0
    %748 = vmatprep.subr.bf16.mxu0 0
    %749 = vmatpush1.bf16.msra.mxu0 0
    %750 = vmatprep.subr.bf16.mxu0 0
    %751 = vmatpush1.bf16.msra.mxu0 0
    %752 = vmatprep.subr.bf16.mxu0 0
    %753 = vmatpush1.bf16.msra.mxu0 %v423
    %754 = vmatprep.subr.bf16.mxu0 0
    %755 = vmatpush1.bf16.msra.mxu0 %v422
    %756 = vmatprep.subr.bf16.mxu0 0
    %757 = vmatpush1.bf16.msra.mxu0 %v421
    %758 = vmatprep.subr.bf16.mxu0 0
    %759 = vmatpush1.bf16.msra.mxu0 %v420
    %760 = vmatprep.subr.bf16.mxu0 0
    %761 = vmatpush2.bf16.msra.mxu0 0
    %762 = vmatprep.subr.bf16.mxu0 0
    %763 = vmatpush2.bf16.msra.mxu0 0
    %764 = vmatprep.subr.bf16.mxu0 0
    %765 = vmatpush2.bf16.msra.mxu0 0
    %766 = vmatprep.subr.bf16.mxu0 0
    %767 = vmatpush2.bf16.msra.mxu0 0
    %768 = vmatprep.subr.bf16.mxu0 0
    %769 = vmatpush2.bf16.msra.mxu0 0
    %770 = vmatprep.subr.bf16.mxu0 0
    %771 = vmatpush2.bf16.msra.mxu0 0
    %772 = vmatprep.subr.bf16.mxu0 0
    %773 = vmatpush2.bf16.msra.mxu0 0
    %774 = vmatprep.subr.bf16.mxu0 0
    %775 = vmatpush2.bf16.msra.mxu0 0
    %776 = vmatprep.mubr.bf16.mxu0 0
    %777 = vmatmul.mubr.bf16.gmra.mxu0 %v721
    %v778 = vpop.f32.mrf.mxu0
    %v779 = vadd.f32 0.0, %v778
    %v780 = vpop.f32.mrf.mxu0
    %v781 = vpop.f32.mrf.mxu0
    %v782 = vadd.f32 0.0, %v781
    %v783 = vpop.f32.mrf.mxu0
    %784 = vmatprep.mubr.bf16.mxu0 0
    %785 = vmatmul.mubr.bf16.gmra.mxu0 %v724
    %v786 = vpop.f32.mrf.mxu0
    %v787 = vadd.f32 0.0, %v786
    %v788 = vpop.f32.mrf.mxu0
    %v789 = vpop.f32.mrf.mxu0
    %v790 = vadd.f32 0.0, %v789
    %v791 = vpop.f32.mrf.mxu0
    %792 = vmatprep.mubr.bf16.mxu0 0
    %793 = vmatmul.mubr.bf16.gmra.mxu0 %v727
    %v794 = vpop.f32.mrf.mxu0
    %v795 = vadd.f32 0.0, %v794
    %v796 = vpop.f32.mrf.mxu0
    %v797 = vpop.f32.mrf.mxu0
    %v798 = vadd.f32 0.0, %v797
    %v799 = vpop.f32.mrf.mxu0
    %800 = vmatprep.mubr.bf16.mxu0 0
    %801 = vmatmul.mubr.bf16.gmra.mxu0 %v730
    %v802 = vpop.f32.mrf.mxu0
    %v803 = vadd.f32 0.0, %v802
    %v804 = vpop.f32.mrf.mxu0
    %v805 = vpop.f32.mrf.mxu0
    %v806 = vadd.f32 0.0, %v805
    %v807 = vpop.f32.mrf.mxu0
    %808 = vmatprep.mubr.bf16.mxu0 0
    %809 = vmatmul.mubr.bf16.gmra.mxu0 %v733
    %v810 = vpop.f32.mrf.mxu0
    %v811 = vadd.f32 0.0, %v810
    %v812 = vpop.f32.mrf.mxu0
    %v813 = vpop.f32.mrf.mxu0
    %v814 = vadd.f32 0.0, %v813
    %v815 = vpop.f32.mrf.mxu0
    %816 = vmatprep.mubr.bf16.mxu0 0
    %817 = vmatmul.mubr.bf16.gmra.mxu0 %v736
    %v818 = vpop.f32.mrf.mxu0
    %v819 = vadd.f32 0.0, %v818
    %v820 = vpop.f32.mrf.mxu0
    %v821 = vpop.f32.mrf.mxu0
    %v822 = vadd.f32 0.0, %v821
    %v823 = vpop.f32.mrf.mxu0
    %824 = vmatprep.mubr.bf16.mxu0 0
    %825 = vmatmul.mubr.bf16.gmra.mxu0 %v739
    %v826 = vpop.f32.mrf.mxu0
    %v827 = vadd.f32 0.0, %v826
    %v828 = vpop.f32.mrf.mxu0
    %v829 = vpop.f32.mrf.mxu0
    %v830 = vadd.f32 0.0, %v829
    %v831 = vpop.f32.mrf.mxu0
    %832 = vmatprep.mubr.bf16.mxu0 0
    %833 = vmatmul.mubr.bf16.gmra.mxu0 %v742
    %v834 = vpop.f32.mrf.mxu0
    %v835 = vadd.f32 0.0, %v834
    %v836 = vpop.f32.mrf.mxu0
    %v837 = vpop.f32.mrf.mxu0
    %v838 = vadd.f32 0.0, %v837
    %v839 = vpop.f32.mrf.mxu0
    %840 = vdwg.mxu0
    %v841 = vld [vmem:[%s3] sm:$0xff]
    %v842 = vld [vmem:[%s3 + $0x8] sm:$0xff]
    %v843 = vld [vmem:[%s3 + $0x10] sm:$0xff]
    %v844 = vld [vmem:[%s3 + $0x18] sm:$0xff]
    %v845 = vld [vmem:[%s3 + $0x20] sm:$0xff]
    %v846 = vld [vmem:[%s3 + $0x28] sm:$0xff]
    %v847 = vld [vmem:[%s3 + $0x30] sm:$0xff]
    %v848 = vld [vmem:[%s3 + $0x38] sm:$0xff]
    %v849 = vld [vmem:[%s3 + $0x40] sm:$0xff]
    %v850 = vld [vmem:[%s3 + $0x48] sm:$0xff]
    %v851 = vld [vmem:[%s3 + $0x50] sm:$0xff]
    %v852 = vld [vmem:[%s3 + $0x58] sm:$0xff]
    %v853 = vld [vmem:[%s3 + $0x60] sm:$0xff]
    %v854 = vld [vmem:[%s3 + $0x68] sm:$0xff]
    %v855 = vld [vmem:[%s3 + $0x70] sm:$0xff]
    %v856 = vld [vmem:[%s3 + $0x78] sm:$0xff]
    %858 = vset.pattern.permute.xlu0 0
    %859 = vperm.xlu0 %858, %v841
    %v860 = vpop.permute.xlu0 %859
    %863 = vset.pattern.permute.xlu0 0
    %864 = vperm.xlu0 %863, %v842
    %v865 = vpop.permute.xlu0 %864
    %868 = vset.pattern.permute.xlu0 0
    %869 = vperm.xlu0 %868, %v843
    %v870 = vpop.permute.xlu0 %869
    %873 = vset.pattern.permute.xlu0 0
    %874 = vperm.xlu0 %873, %v844
    %v875 = vpop.permute.xlu0 %874
    %878 = vset.pattern.permute.xlu0 0
    %879 = vperm.xlu0 %878, %v845
    %v880 = vpop.permute.xlu0 %879
    %883 = vset.pattern.permute.xlu0 0
    %884 = vperm.xlu0 %883, %v846
    %v885 = vpop.permute.xlu0 %884
    %888 = vset.pattern.permute.xlu0 0
    %889 = vperm.xlu0 %888, %v847
    %v890 = vpop.permute.xlu0 %889
    %893 = vset.pattern.permute.xlu0 0
    %894 = vperm.xlu0 %893, %v848
    %v895 = vpop.permute.xlu0 %894
    %898 = vset.pattern.permute.xlu0 0
    %899 = vperm.xlu0 %898, %v849
    %v900 = vpop.permute.xlu0 %899
    %903 = vset.pattern.permute.xlu0 0
    %904 = vperm.xlu0 %903, %v850
    %v905 = vpop.permute.xlu0 %904
    %908 = vset.pattern.permute.xlu0 0
    %909 = vperm.xlu0 %908, %v851
    %v910 = vpop.permute.xlu0 %909
    %913 = vset.pattern.permute.xlu0 0
    %914 = vperm.xlu0 %913, %v852
    %v915 = vpop.permute.xlu0 %914
    %918 = vset.pattern.permute.xlu0 0
    %919 = vperm.xlu0 %918, %v853
    %v920 = vpop.permute.xlu0 %919
    %923 = vset.pattern.permute.xlu0 0
    %924 = vperm.xlu0 %923, %v854
    %v925 = vpop.permute.xlu0 %924
    %928 = vset.pattern.permute.xlu0 0
    %929 = vperm.xlu0 %928, %v855
    %v930 = vpop.permute.xlu0 %929
    %933 = vset.pattern.permute.xlu0 0
    %934 = vperm.xlu0 %933, %v856
    %v935 = vpop.permute.xlu0 %934
    %v937 = vadd.f32 %v488, %v860
    %v938 = vadd.f32 %v779, %v860
    %v939 = vadd.f32 %v491, %v865
    %v940 = vadd.f32 %v782, %v865
    %v941 = vadd.f32 %v496, %v870
    %v942 = vadd.f32 %v787, %v870
    %v943 = vadd.f32 %v499, %v875
    %v944 = vadd.f32 %v790, %v875
    %v945 = vadd.f32 %v504, %v880
    %v946 = vadd.f32 %v795, %v880
    %v947 = vadd.f32 %v507, %v885
    %v948 = vadd.f32 %v798, %v885
    %v949 = vadd.f32 %v512, %v890
    %v950 = vadd.f32 %v803, %v890
    %v951 = vadd.f32 %v515, %v895
    %v952 = vadd.f32 %v806, %v895
    %v953 = vadd.f32 %v520, %v900
    %v954 = vadd.f32 %v811, %v900
    %v955 = vadd.f32 %v523, %v905
    %v956 = vadd.f32 %v814, %v905
    %v957 = vadd.f32 %v528, %v910
    %v958 = vadd.f32 %v819, %v910
    %v959 = vadd.f32 %v531, %v915
    %v960 = vadd.f32 %v822, %v915
    %v961 = vadd.f32 %v536, %v920
    %v962 = vadd.f32 %v827, %v920
    %v963 = vadd.f32 %v539, %v925
    %v964 = vadd.f32 %v830, %v925
    %v965 = vadd.f32 %v544, %v930
    %v966 = vadd.f32 %v835, %v930
    %v967 = vadd.f32 %v547, %v935
    %v968 = vadd.f32 %v838, %v935
    %v969 = vmax.f32 %v937, 0.0
    %v970 = vmax.f32 %v938, 0.0
    %v971 = vmax.f32 %v939, 0.0
    %v972 = vmax.f32 %v940, 0.0
    %v973 = vmax.f32 %v941, 0.0
    %v974 = vmax.f32 %v942, 0.0
    %v975 = vmax.f32 %v943, 0.0
    %v976 = vmax.f32 %v944, 0.0
    %v977 = vmax.f32 %v945, 0.0
    %v978 = vmax.f32 %v946, 0.0
    %v979 = vmax.f32 %v947, 0.0
    %v980 = vmax.f32 %v948, 0.0
    %v981 = vmax.f32 %v949, 0.0
    %v982 = vmax.f32 %v950, 0.0
    %v983 = vmax.f32 %v951, 0.0
    %v984 = vmax.f32 %v952, 0.0
    %v985 = vmax.f32 %v953, 0.0
    %v986 = vmax.f32 %v954, 0.0
    %v987 = vmax.f32 %v955, 0.0
    %v988 = vmax.f32 %v956, 0.0
    %v989 = vmax.f32 %v957, 0.0
    %v990 = vmax.f32 %v958, 0.0
    %v991 = vmax.f32 %v959, 0.0
    %v992 = vmax.f32 %v960, 0.0
    %v993 = vmax.f32 %v961, 0.0
    %v994 = vmax.f32 %v962, 0.0
    %v995 = vmax.f32 %v963, 0.0
    %v996 = vmax.f32 %v964, 0.0
    %v997 = vmax.f32 %v965, 0.0
    %v998 = vmax.f32 %v966, 0.0
    %v999 = vmax.f32 %v967, 0.0
    %v1000 = vmax.f32 %v968, 0.0
    %v1001 = vld [vmem:[#allocation6] sm:$0xf]
    %v1002 = vld [vmem:[#allocation6 + $0x4] sm:$0xf]
    %v1003 = vld [vmem:[#allocation6 + $0x8] sm:$0xf]
    %v1004 = vld [vmem:[#allocation6 + $0xc] sm:$0xf]
    %v1005 = vld [vmem:[#allocation6 + $0x10] sm:$0xf]
    %v1006 = vld [vmem:[#allocation6 + $0x14] sm:$0xf]
    %v1007 = vld [vmem:[#allocation6 + $0x18] sm:$0xf]
    %v1008 = vld [vmem:[#allocation6 + $0x1c] sm:$0xf]
    %v1009 = vld [vmem:[#allocation6 + $0x20] sm:$0xf]
    %v1010 = vld [vmem:[#allocation6 + $0x24] sm:$0xf]
    %v1011 = vld [vmem:[#allocation6 + $0x28] sm:$0xf]
    %v1012 = vld [vmem:[#allocation6 + $0x2c] sm:$0xf]
    %v1013 = vld [vmem:[#allocation6 + $0x30] sm:$0xf]
    %v1014 = vld [vmem:[#allocation6 + $0x34] sm:$0xf]
    %v1015 = vld [vmem:[#allocation6 + $0x38] sm:$0xf]
    %v1016 = vld [vmem:[#allocation6 + $0x3c] sm:$0xf]
    %v1017 = vpack.c.bf16 %v971, %v969
    %v1018 = vpack.c.bf16 %v972, %v970
    %v1019 = vpack.c.bf16 %v975, %v973
    %v1020 = vpack.c.bf16 %v976, %v974
    %v1021 = vpack.c.bf16 %v979, %v977
    %v1022 = vpack.c.bf16 %v980, %v978
    %v1023 = vpack.c.bf16 %v983, %v981
    %v1024 = vpack.c.bf16 %v984, %v982
    %v1025 = vpack.c.bf16 %v987, %v985
    %v1026 = vpack.c.bf16 %v988, %v986
    %v1027 = vpack.c.bf16 %v991, %v989
    %v1028 = vpack.c.bf16 %v992, %v990
    %v1029 = vpack.c.bf16 %v995, %v993
    %v1030 = vpack.c.bf16 %v996, %v994
    %v1031 = vpack.c.bf16 %v999, %v997
    %v1032 = vpack.c.bf16 %v1000, %v998
    %v1033 = vld [vmem:[#allocation7] sm:$0xff]
    %v1034 = vld [vmem:[#allocation7 + $0x8] sm:$0xff]
    %v1035 = vld [vmem:[#allocation7 + $0x10] sm:$0xff]
    %v1036 = vld [vmem:[#allocation7 + $0x18] sm:$0xff]
    %v1037 = vld [vmem:[#allocation7 + $0x20] sm:$0xff]
    %v1038 = vld [vmem:[#allocation7 + $0x28] sm:$0xff]
    %v1039 = vld [vmem:[#allocation7 + $0x30] sm:$0xff]
    %v1040 = vld [vmem:[#allocation7 + $0x38] sm:$0xff]
    %v1041 = vld [vmem:[#allocation7 + $0x40] sm:$0xff]
    %v1042 = vld [vmem:[#allocation7 + $0x48] sm:$0xff]
    %v1043 = vld [vmem:[#allocation7 + $0x50] sm:$0xff]
    %v1044 = vld [vmem:[#allocation7 + $0x58] sm:$0xff]
    %v1045 = vld [vmem:[#allocation7 + $0x60] sm:$0xff]
    %v1046 = vld [vmem:[#allocation7 + $0x68] sm:$0xff]
    %v1047 = vld [vmem:[#allocation7 + $0x70] sm:$0xff]
    %v1048 = vld [vmem:[#allocation7 + $0x78] sm:$0xff]
    %v1049 = vld [vmem:[#allocation7 + $0x80] sm:$0xff]
    %v1050 = vld [vmem:[#allocation7 + $0x88] sm:$0xff]
    %v1051 = vld [vmem:[#allocation7 + $0x90] sm:$0xff]
    %v1052 = vld [vmem:[#allocation7 + $0x98] sm:$0xff]
    %v1053 = vld [vmem:[#allocation7 + $0xa0] sm:$0xff]
    %v1054 = vld [vmem:[#allocation7 + $0xa8] sm:$0xff]
    %v1055 = vld [vmem:[#allocation7 + $0xb0] sm:$0xff]
    %v1056 = vld [vmem:[#allocation7 + $0xb8] sm:$0xff]
    %v1057 = vld [vmem:[#allocation7 + $0xc0] sm:$0xff]
    %v1058 = vld [vmem:[#allocation7 + $0xc8] sm:$0xff]
    %v1059 = vld [vmem:[#allocation7 + $0xd0] sm:$0xff]
    %v1060 = vld [vmem:[#allocation7 + $0xd8] sm:$0xff]
    %v1061 = vld [vmem:[#allocation7 + $0xe0] sm:$0xff]
    %v1062 = vld [vmem:[#allocation7 + $0xe8] sm:$0xff]
    %v1063 = vld [vmem:[#allocation7 + $0xf0] sm:$0xff]
    %v1064 = vld [vmem:[#allocation7 + $0xf8] sm:$0xff]
    %v1081 = vunpack.c.l.b16 %v1001
    %v1082 = vunpack.c.l.b16 %v1002
    %v1083 = vunpack.c.l.b16 %v1003
    %v1084 = vunpack.c.l.b16 %v1004
    %v1085 = vunpack.c.l.b16 %v1005
    %v1086 = vunpack.c.l.b16 %v1006
    %v1087 = vunpack.c.l.b16 %v1007
    %v1088 = vunpack.c.l.b16 %v1008
    %v1089 = vunpack.c.l.b16 %v1009
    %v1090 = vunpack.c.l.b16 %v1010
    %v1091 = vunpack.c.l.b16 %v1011
    %v1092 = vunpack.c.l.b16 %v1012
    %v1093 = vunpack.c.l.b16 %v1013
    %v1094 = vunpack.c.l.b16 %v1014
    %v1095 = vunpack.c.l.b16 %v1015
    %v1096 = vunpack.c.l.b16 %v1016
    %v1097 = vpack.c.b16 %v1082, %v1081
    %v1098 = vpack.c.b16 %v1084, %v1083
    %v1099 = vpack.c.b16 %v1086, %v1085
    %v1100 = vpack.c.b16 %v1088, %v1087
    %v1101 = vpack.c.b16 %v1090, %v1089
    %v1102 = vpack.c.b16 %v1092, %v1091
    %v1103 = vpack.c.b16 %v1094, %v1093
    %v1104 = vpack.c.b16 %v1096, %v1095
    %1113 = vmatprep.subr.bf16.mxu0 %v1032
    %1114 = vmatpush1.bf16.msra.mxu0 %v1031
    %1115 = vmatprep.subr.bf16.mxu0 %v1030
    %1116 = vmatpush1.bf16.msra.mxu0 %v1029
    %1117 = vmatprep.subr.bf16.mxu0 %v1028
    %1118 = vmatpush1.bf16.msra.mxu0 %v1027
    %1119 = vmatprep.subr.bf16.mxu0 %v1026
    %1120 = vmatpush1.bf16.msra.mxu0 %v1025
    %1121 = vmatprep.subr.bf16.mxu0 %v1024
    %1122 = vmatpush1.bf16.msra.mxu0 %v1023
    %1123 = vmatprep.subr.bf16.mxu0 %v1022
    %1124 = vmatpush1.bf16.msra.mxu0 %v1021
    %1125 = vmatprep.subr.bf16.mxu0 %v1020
    %1126 = vmatpush1.bf16.msra.mxu0 %v1019
    %1127 = vmatprep.subr.bf16.mxu0 %v1018
    %1128 = vmatpush1.bf16.msra.mxu0 %v1017
    %1129 = vmatprep.subr.bf16.mxu0 0
    %1130 = vmatpush2.bf16.msra.mxu0 0
    %1131 = vmatprep.subr.bf16.mxu0 0
    %1132 = vmatpush2.bf16.msra.mxu0 0
    %1133 = vmatprep.subr.bf16.mxu0 0
    %1134 = vmatpush2.bf16.msra.mxu0 0
    %1135 = vmatprep.subr.bf16.mxu0 0
    %1136 = vmatpush2.bf16.msra.mxu0 0
    %1137 = vmatprep.subr.bf16.mxu0 0
    %1138 = vmatpush2.bf16.msra.mxu0 0
    %1139 = vmatprep.subr.bf16.mxu0 0
    %1140 = vmatpush2.bf16.msra.mxu0 0
    %1141 = vmatprep.subr.bf16.mxu0 0
    %1142 = vmatpush2.bf16.msra.mxu0 0
    %1143 = vmatprep.subr.bf16.mxu0 0
    %1144 = vmatpush2.bf16.msra.mxu0 0
    %1145 = vmatprep.mubr.bf16.mxu0 0
    %1146 = vmatmul.mubr.bf16.gmra.mxu0 %v1097
    %v1147 = vpop.f32.mrf.mxu0
    %v1148 = vadd.f32 %v1033, %v1147
    %v1149 = vpop.f32.mrf.mxu0
    %v1150 = vadd.f32 %v1034, %v1149
    %v1151 = vpop.f32.mrf.mxu0
    %v1152 = vadd.f32 %v1035, %v1151
    %v1153 = vpop.f32.mrf.mxu0
    %v1154 = vadd.f32 %v1036, %v1153
    %1155 = vmatprep.mubr.bf16.mxu0 0
    %1156 = vmatmul.mubr.bf16.gmra.mxu0 %v1098
    %v1157 = vpop.f32.mrf.mxu0
    %v1158 = vadd.f32 %v1037, %v1157
    %v1159 = vpop.f32.mrf.mxu0
    %v1160 = vadd.f32 %v1038, %v1159
    %v1161 = vpop.f32.mrf.mxu0
    %v1162 = vadd.f32 %v1039, %v1161
    %v1163 = vpop.f32.mrf.mxu0
    %v1164 = vadd.f32 %v1040, %v1163
    %1165 = vmatprep.mubr.bf16.mxu0 0
    %1166 = vmatmul.mubr.bf16.gmra.mxu0 %v1099
    %v1167 = vpop.f32.mrf.mxu0
    %v1168 = vadd.f32 %v1041, %v1167
    %v1169 = vpop.f32.mrf.mxu0
    %v1170 = vadd.f32 %v1042, %v1169
    %v1171 = vpop.f32.mrf.mxu0
    %v1172 = vadd.f32 %v1043, %v1171
    %v1173 = vpop.f32.mrf.mxu0
    %v1174 = vadd.f32 %v1044, %v1173
    %1175 = vmatprep.mubr.bf16.mxu0 0
    %1176 = vmatmul.mubr.bf16.gmra.mxu0 %v1100
    %v1177 = vpop.f32.mrf.mxu0
    %v1178 = vadd.f32 %v1045, %v1177
    %v1179 = vpop.f32.mrf.mxu0
    %v1180 = vadd.f32 %v1046, %v1179
    %v1181 = vpop.f32.mrf.mxu0
    %v1182 = vadd.f32 %v1047, %v1181
    %v1183 = vpop.f32.mrf.mxu0
    %v1184 = vadd.f32 %v1048, %v1183
    %1185 = vmatprep.mubr.bf16.mxu0 0
    %1186 = vmatmul.mubr.bf16.gmra.mxu0 %v1101
    %v1187 = vpop.f32.mrf.mxu0
    %v1188 = vadd.f32 %v1049, %v1187
    %v1189 = vpop.f32.mrf.mxu0
    %v1190 = vadd.f32 %v1050, %v1189
    %v1191 = vpop.f32.mrf.mxu0
    %v1192 = vadd.f32 %v1051, %v1191
    %v1193 = vpop.f32.mrf.mxu0
    %v1194 = vadd.f32 %v1052, %v1193
    %1195 = vmatprep.mubr.bf16.mxu0 0
    %1196 = vmatmul.mubr.bf16.gmra.mxu0 %v1102
    %v1197 = vpop.f32.mrf.mxu0
    %v1198 = vadd.f32 %v1053, %v1197
    %v1199 = vpop.f32.mrf.mxu0
    %v1200 = vadd.f32 %v1054, %v1199
    %v1201 = vpop.f32.mrf.mxu0
    %v1202 = vadd.f32 %v1055, %v1201
    %v1203 = vpop.f32.mrf.mxu0
    %v1204 = vadd.f32 %v1056, %v1203
    %1205 = vmatprep.mubr.bf16.mxu0 0
    %1206 = vmatmul.mubr.bf16.gmra.mxu0 %v1103
    %v1207 = vpop.f32.mrf.mxu0
    %v1208 = vadd.f32 %v1057, %v1207
    %v1209 = vpop.f32.mrf.mxu0
    %v1210 = vadd.f32 %v1058, %v1209
    %v1211 = vpop.f32.mrf.mxu0
    %v1212 = vadd.f32 %v1059, %v1211
    %v1213 = vpop.f32.mrf.mxu0
    %v1214 = vadd.f32 %v1060, %v1213
    %1215 = vmatprep.mubr.bf16.mxu0 0
    %1216 = vmatmul.mubr.bf16.gmra.mxu0 %v1104
    %v1217 = vpop.f32.mrf.mxu0
    %v1218 = vadd.f32 %v1061, %v1217
    %v1219 = vpop.f32.mrf.mxu0
    %v1220 = vadd.f32 %v1062, %v1219
    %v1221 = vpop.f32.mrf.mxu0
    %v1222 = vadd.f32 %v1063, %v1221
    %v1223 = vpop.f32.mrf.mxu0
    %v1224 = vadd.f32 %v1064, %v1223
    %1225 = vdwg.mxu0
    %v1226 = vmax.f32 %v1148, 0.0
    %v1227 = vmax.f32 %v1150, 0.0
    %v1228 = vmax.f32 %v1152, 0.0
    %v1229 = vmax.f32 %v1154, 0.0
    %v1230 = vmax.f32 %v1158, 0.0
    %v1231 = vmax.f32 %v1160, 0.0
    %v1232 = vmax.f32 %v1162, 0.0
    %v1233 = vmax.f32 %v1164, 0.0
    %v1234 = vmax.f32 %v1168, 0.0
    %v1235 = vmax.f32 %v1170, 0.0
    %v1236 = vmax.f32 %v1172, 0.0
    %v1237 = vmax.f32 %v1174, 0.0
    %v1238 = vmax.f32 %v1178, 0.0
    %v1239 = vmax.f32 %v1180, 0.0
    %v1240 = vmax.f32 %v1182, 0.0
    %v1241 = vmax.f32 %v1184, 0.0
    %v1242 = vmax.f32 %v1188, 0.0
    %v1243 = vmax.f32 %v1190, 0.0
    %v1244 = vmax.f32 %v1192, 0.0
    %v1245 = vmax.f32 %v1194, 0.0
    %v1246 = vmax.f32 %v1198, 0.0
    %v1247 = vmax.f32 %v1200, 0.0
    %v1248 = vmax.f32 %v1202, 0.0
    %v1249 = vmax.f32 %v1204, 0.0
    %v1250 = vmax.f32 %v1208, 0.0
    %v1251 = vmax.f32 %v1210, 0.0
    %v1252 = vmax.f32 %v1212, 0.0
    %v1253 = vmax.f32 %v1214, 0.0
    %v1254 = vmax.f32 %v1218, 0.0
    %v1255 = vmax.f32 %v1220, 0.0
    %v1256 = vmax.f32 %v1222, 0.0
    %v1257 = vmax.f32 %v1224, 0.0
    %v1258 = vld [vmem:[#allocation9] sm:$0xf]
    %v1259 = vld [vmem:[#allocation9 + $0x4] sm:$0xf]
    %v1260 = vld [vmem:[#allocation9 + $0x8] sm:$0xf]
    %v1261 = vld [vmem:[#allocation9 + $0xc] sm:$0xf]
    %v1262 = vld [vmem:[#allocation9 + $0x10] sm:$0xf]
    %v1263 = vld [vmem:[#allocation9 + $0x14] sm:$0xf]
    %v1264 = vld [vmem:[#allocation9 + $0x18] sm:$0xf]
    %v1265 = vld [vmem:[#allocation9 + $0x1c] sm:$0xf]
    %v1266 = vld [vmem:[#allocation9 + $0x20] sm:$0xf]
    %v1267 = vld [vmem:[#allocation9 + $0x24] sm:$0xf]
    %v1268 = vld [vmem:[#allocation9 + $0x28] sm:$0xf]
    %v1269 = vld [vmem:[#allocation9 + $0x2c] sm:$0xf]
    %v1270 = vld [vmem:[#allocation9 + $0x30] sm:$0xf]
    %v1271 = vld [vmem:[#allocation9 + $0x34] sm:$0xf]
    %v1272 = vld [vmem:[#allocation9 + $0x38] sm:$0xf]
    %v1273 = vld [vmem:[#allocation9 + $0x3c] sm:$0xf]
    %v1274 = vpack.c.bf16 %v1228, %v1226
    %v1275 = vpack.c.bf16 %v1229, %v1227
    %v1276 = vpack.c.bf16 %v1232, %v1230
    %v1277 = vpack.c.bf16 %v1233, %v1231
    %v1278 = vpack.c.bf16 %v1236, %v1234
    %v1279 = vpack.c.bf16 %v1237, %v1235
    %v1280 = vpack.c.bf16 %v1240, %v1238
    %v1281 = vpack.c.bf16 %v1241, %v1239
    %v1282 = vpack.c.bf16 %v1244, %v1242
    %v1283 = vpack.c.bf16 %v1245, %v1243
    %v1284 = vpack.c.bf16 %v1248, %v1246
    %v1285 = vpack.c.bf16 %v1249, %v1247
    %v1286 = vpack.c.bf16 %v1252, %v1250
    %v1287 = vpack.c.bf16 %v1253, %v1251
    %v1288 = vpack.c.bf16 %v1256, %v1254
    %v1289 = vpack.c.bf16 %v1257, %v1255
    %v1290 = vld [vmem:[#allocation10] sm:$0xff]
    %v1291 = vld [vmem:[#allocation10 + $0x8] sm:$0xff]
    %v1292 = vld [vmem:[#allocation10 + $0x10] sm:$0xff]
    %v1293 = vld [vmem:[#allocation10 + $0x18] sm:$0xff]
    %v1294 = vld [vmem:[#allocation10 + $0x20] sm:$0xff]
    %v1295 = vld [vmem:[#allocation10 + $0x28] sm:$0xff]
    %v1296 = vld [vmem:[#allocation10 + $0x30] sm:$0xff]
    %v1297 = vld [vmem:[#allocation10 + $0x38] sm:$0xff]
    %v1298 = vld [vmem:[#allocation10 + $0x40] sm:$0xff]
    %v1299 = vld [vmem:[#allocation10 + $0x48] sm:$0xff]
    %v1300 = vld [vmem:[#allocation10 + $0x50] sm:$0xff]
    %v1301 = vld [vmem:[#allocation10 + $0x58] sm:$0xff]
    %v1302 = vld [vmem:[#allocation10 + $0x60] sm:$0xff]
    %v1303 = vld [vmem:[#allocation10 + $0x68] sm:$0xff]
    %v1304 = vld [vmem:[#allocation10 + $0x70] sm:$0xff]
    %v1305 = vld [vmem:[#allocation10 + $0x78] sm:$0xff]
    %v1306 = vld [vmem:[#allocation10 + $0x80] sm:$0xff]
    %v1307 = vld [vmem:[#allocation10 + $0x88] sm:$0xff]
    %v1308 = vld [vmem:[#allocation10 + $0x90] sm:$0xff]
    %v1309 = vld [vmem:[#allocation10 + $0x98] sm:$0xff]
    %v1310 = vld [vmem:[#allocation10 + $0xa0] sm:$0xff]
    %v1311 = vld [vmem:[#allocation10 + $0xa8] sm:$0xff]
    %v1312 = vld [vmem:[#allocation10 + $0xb0] sm:$0xff]
    %v1313 = vld [vmem:[#allocation10 + $0xb8] sm:$0xff]
    %v1314 = vld [vmem:[#allocation10 + $0xc0] sm:$0xff]
    %v1315 = vld [vmem:[#allocation10 + $0xc8] sm:$0xff]
    %v1316 = vld [vmem:[#allocation10 + $0xd0] sm:$0xff]
    %v1317 = vld [vmem:[#allocation10 + $0xd8] sm:$0xff]
    %v1318 = vld [vmem:[#allocation10 + $0xe0] sm:$0xff]
    %v1319 = vld [vmem:[#allocation10 + $0xe8] sm:$0xff]
    %v1320 = vld [vmem:[#allocation10 + $0xf0] sm:$0xff]
    %v1321 = vld [vmem:[#allocation10 + $0xf8] sm:$0xff]
    %v1338 = vunpack.c.l.b16 %v1258
    %v1339 = vunpack.c.l.b16 %v1259
    %v1340 = vunpack.c.l.b16 %v1260
    %v1341 = vunpack.c.l.b16 %v1261
    %v1342 = vunpack.c.l.b16 %v1262
    %v1343 = vunpack.c.l.b16 %v1263
    %v1344 = vunpack.c.l.b16 %v1264
    %v1345 = vunpack.c.l.b16 %v1265
    %v1346 = vunpack.c.l.b16 %v1266
    %v1347 = vunpack.c.l.b16 %v1267
    %v1348 = vunpack.c.l.b16 %v1268
    %v1349 = vunpack.c.l.b16 %v1269
    %v1350 = vunpack.c.l.b16 %v1270
    %v1351 = vunpack.c.l.b16 %v1271
    %v1352 = vunpack.c.l.b16 %v1272
    %v1353 = vunpack.c.l.b16 %v1273
    %v1354 = vpack.c.b16 %v1339, %v1338
    %v1355 = vpack.c.b16 %v1341, %v1340
    %v1356 = vpack.c.b16 %v1343, %v1342
    %v1357 = vpack.c.b16 %v1345, %v1344
    %v1358 = vpack.c.b16 %v1347, %v1346
    %v1359 = vpack.c.b16 %v1349, %v1348
    %v1360 = vpack.c.b16 %v1351, %v1350
    %v1361 = vpack.c.b16 %v1353, %v1352
    %1370 = vmatprep.subr.bf16.mxu0 %v1289
    %1371 = vmatpush1.bf16.msra.mxu0 %v1288
    %1372 = vmatprep.subr.bf16.mxu0 %v1287
    %1373 = vmatpush1.bf16.msra.mxu0 %v1286
    %1374 = vmatprep.subr.bf16.mxu0 %v1285
    %1375 = vmatpush1.bf16.msra.mxu0 %v1284
    %1376 = vmatprep.subr.bf16.mxu0 %v1283
    %1377 = vmatpush1.bf16.msra.mxu0 %v1282
    %1378 = vmatprep.subr.bf16.mxu0 %v1281
    %1379 = vmatpush1.bf16.msra.mxu0 %v1280
    %1380 = vmatprep.subr.bf16.mxu0 %v1279
    %1381 = vmatpush1.bf16.msra.mxu0 %v1278
    %1382 = vmatprep.subr.bf16.mxu0 %v1277
    %1383 = vmatpush1.bf16.msra.mxu0 %v1276
    %1384 = vmatprep.subr.bf16.mxu0 %v1275
    %1385 = vmatpush1.bf16.msra.mxu0 %v1274
    %1386 = vmatprep.subr.bf16.mxu0 0
    %1387 = vmatpush2.bf16.msra.mxu0 0
    %1388 = vmatprep.subr.bf16.mxu0 0
    %1389 = vmatpush2.bf16.msra.mxu0 0
    %1390 = vmatprep.subr.bf16.mxu0 0
    %1391 = vmatpush2.bf16.msra.mxu0 0
    %1392 = vmatprep.subr.bf16.mxu0 0
    %1393 = vmatpush2.bf16.msra.mxu0 0
    %1394 = vmatprep.subr.bf16.mxu0 0
    %1395 = vmatpush2.bf16.msra.mxu0 0
    %1396 = vmatprep.subr.bf16.mxu0 0
    %1397 = vmatpush2.bf16.msra.mxu0 0
    %1398 = vmatprep.subr.bf16.mxu0 0
    %1399 = vmatpush2.bf16.msra.mxu0 0
    %1400 = vmatprep.subr.bf16.mxu0 0
    %1401 = vmatpush2.bf16.msra.mxu0 0
    %1402 = vmatprep.mubr.bf16.mxu0 0
    %1403 = vmatmul.mubr.bf16.gmra.mxu0 %v1354
    %v1404 = vpop.f32.mrf.mxu0
    %v1405 = vadd.f32 %v1290, %v1404
    %v1406 = vpop.f32.mrf.mxu0
    %v1407 = vadd.f32 %v1291, %v1406
    %v1408 = vpop.f32.mrf.mxu0
    %v1409 = vadd.f32 %v1292, %v1408
    %v1410 = vpop.f32.mrf.mxu0
    %v1411 = vadd.f32 %v1293, %v1410
    %1412 = vmatprep.mubr.bf16.mxu0 0
    %1413 = vmatmul.mubr.bf16.gmra.mxu0 %v1355
    %v1414 = vpop.f32.mrf.mxu0
    %v1415 = vadd.f32 %v1294, %v1414
    %v1416 = vpop.f32.mrf.mxu0
    %v1417 = vadd.f32 %v1295, %v1416
    %v1418 = vpop.f32.mrf.mxu0
    %v1419 = vadd.f32 %v1296, %v1418
    %v1420 = vpop.f32.mrf.mxu0
    %v1421 = vadd.f32 %v1297, %v1420
    %1422 = vmatprep.mubr.bf16.mxu0 0
    %1423 = vmatmul.mubr.bf16.gmra.mxu0 %v1356
    %v1424 = vpop.f32.mrf.mxu0
    %v1425 = vadd.f32 %v1298, %v1424
    %v1426 = vpop.f32.mrf.mxu0
    %v1427 = vadd.f32 %v1299, %v1426
    %v1428 = vpop.f32.mrf.mxu0
    %v1429 = vadd.f32 %v1300, %v1428
    %v1430 = vpop.f32.mrf.mxu0
    %v1431 = vadd.f32 %v1301, %v1430
    %1432 = vmatprep.mubr.bf16.mxu0 0
    %1433 = vmatmul.mubr.bf16.gmra.mxu0 %v1357
    %v1434 = vpop.f32.mrf.mxu0
    %v1435 = vadd.f32 %v1302, %v1434
    %v1436 = vpop.f32.mrf.mxu0
    %v1437 = vadd.f32 %v1303, %v1436
    %v1438 = vpop.f32.mrf.mxu0
    %v1439 = vadd.f32 %v1304, %v1438
    %v1440 = vpop.f32.mrf.mxu0
    %v1441 = vadd.f32 %v1305, %v1440
    %1442 = vmatprep.mubr.bf16.mxu0 0
    %1443 = vmatmul.mubr.bf16.gmra.mxu0 %v1358
    %v1444 = vpop.f32.mrf.mxu0
    %v1445 = vadd.f32 %v1306, %v1444
    %v1446 = vpop.f32.mrf.mxu0
    %v1447 = vadd.f32 %v1307, %v1446
    %v1448 = vpop.f32.mrf.mxu0
    %v1449 = vadd.f32 %v1308, %v1448
    %v1450 = vpop.f32.mrf.mxu0
    %v1451 = vadd.f32 %v1309, %v1450
    %1452 = vmatprep.mubr.bf16.mxu0 0
    %1453 = vmatmul.mubr.bf16.gmra.mxu0 %v1359
    %v1454 = vpop.f32.mrf.mxu0
    %v1455 = vadd.f32 %v1310, %v1454
    %v1456 = vpop.f32.mrf.mxu0
    %v1457 = vadd.f32 %v1311, %v1456
    %v1458 = vpop.f32.mrf.mxu0
    %v1459 = vadd.f32 %v1312, %v1458
    %v1460 = vpop.f32.mrf.mxu0
    %v1461 = vadd.f32 %v1313, %v1460
    %1462 = vmatprep.mubr.bf16.mxu0 0
    %1463 = vmatmul.mubr.bf16.gmra.mxu0 %v1360
    %v1464 = vpop.f32.mrf.mxu0
    %v1465 = vadd.f32 %v1314, %v1464
    %v1466 = vpop.f32.mrf.mxu0
    %v1467 = vadd.f32 %v1315, %v1466
    %v1468 = vpop.f32.mrf.mxu0
    %v1469 = vadd.f32 %v1316, %v1468
    %v1470 = vpop.f32.mrf.mxu0
    %v1471 = vadd.f32 %v1317, %v1470
    %1472 = vmatprep.mubr.bf16.mxu0 0
    %1473 = vmatmul.mubr.bf16.gmra.mxu0 %v1361
    %v1474 = vpop.f32.mrf.mxu0
    %v1475 = vadd.f32 %v1318, %v1474
    %v1476 = vpop.f32.mrf.mxu0
    %v1477 = vadd.f32 %v1319, %v1476
    %v1478 = vpop.f32.mrf.mxu0
    %v1479 = vadd.f32 %v1320, %v1478
    %v1480 = vpop.f32.mrf.mxu0
    %v1481 = vadd.f32 %v1321, %v1480
    %1482 = vdwg.mxu0
    %v1483 = vmax.f32 %v1405, 0.0
    %v1484 = vmax.f32 %v1407, 0.0
    %v1485 = vmax.f32 %v1409, 0.0
    %v1486 = vmax.f32 %v1411, 0.0
    %v1487 = vmax.f32 %v1415, 0.0
    %v1488 = vmax.f32 %v1417, 0.0
    %v1489 = vmax.f32 %v1419, 0.0
    %v1490 = vmax.f32 %v1421, 0.0
    %v1491 = vmax.f32 %v1425, 0.0
    %v1492 = vmax.f32 %v1427, 0.0
    %v1493 = vmax.f32 %v1429, 0.0
    %v1494 = vmax.f32 %v1431, 0.0
    %v1495 = vmax.f32 %v1435, 0.0
    %v1496 = vmax.f32 %v1437, 0.0
    %v1497 = vmax.f32 %v1439, 0.0
    %v1498 = vmax.f32 %v1441, 0.0
    %v1499 = vmax.f32 %v1445, 0.0
    %v1500 = vmax.f32 %v1447, 0.0
    %v1501 = vmax.f32 %v1449, 0.0
    %v1502 = vmax.f32 %v1451, 0.0
    %v1503 = vmax.f32 %v1455, 0.0
    %v1504 = vmax.f32 %v1457, 0.0
    %v1505 = vmax.f32 %v1459, 0.0
    %v1506 = vmax.f32 %v1461, 0.0
    %v1507 = vmax.f32 %v1465, 0.0
    %v1508 = vmax.f32 %v1467, 0.0
    %v1509 = vmax.f32 %v1469, 0.0
    %v1510 = vmax.f32 %v1471, 0.0
    %v1511 = vmax.f32 %v1475, 0.0
    %v1512 = vmax.f32 %v1477, 0.0
    %v1513 = vmax.f32 %v1479, 0.0
    %v1514 = vmax.f32 %v1481, 0.0
    %v1515 = vld [vmem:[#allocation12] sm:$0xf]
    %v1516 = vld [vmem:[#allocation12 + $0x4] sm:$0xf]
    %v1517 = vld [vmem:[#allocation12 + $0x8] sm:$0xf]
    %v1518 = vld [vmem:[#allocation12 + $0xc] sm:$0xf]
    %v1519 = vld [vmem:[#allocation12 + $0x10] sm:$0xf]
    %v1520 = vld [vmem:[#allocation12 + $0x14] sm:$0xf]
    %v1521 = vld [vmem:[#allocation12 + $0x18] sm:$0xf]
    %v1522 = vld [vmem:[#allocation12 + $0x1c] sm:$0xf]
    %v1523 = vld [vmem:[#allocation12 + $0x20] sm:$0xf]
    %v1524 = vld [vmem:[#allocation12 + $0x24] sm:$0xf]
    %v1525 = vld [vmem:[#allocation12 + $0x28] sm:$0xf]
    %v1526 = vld [vmem:[#allocation12 + $0x2c] sm:$0xf]
    %v1527 = vld [vmem:[#allocation12 + $0x30] sm:$0xf]
    %v1528 = vld [vmem:[#allocation12 + $0x34] sm:$0xf]
    %v1529 = vld [vmem:[#allocation12 + $0x38] sm:$0xf]
    %v1530 = vld [vmem:[#allocation12 + $0x3c] sm:$0xf]
    %v1531 = vpack.c.bf16 %v1485, %v1483
    %v1532 = vpack.c.bf16 %v1486, %v1484
    %v1533 = vpack.c.bf16 %v1489, %v1487
    %v1534 = vpack.c.bf16 %v1490, %v1488
    %v1535 = vpack.c.bf16 %v1493, %v1491
    %v1536 = vpack.c.bf16 %v1494, %v1492
    %v1537 = vpack.c.bf16 %v1497, %v1495
    %v1538 = vpack.c.bf16 %v1498, %v1496
    %v1539 = vpack.c.bf16 %v1501, %v1499
    %v1540 = vpack.c.bf16 %v1502, %v1500
    %v1541 = vpack.c.bf16 %v1505, %v1503
    %v1542 = vpack.c.bf16 %v1506, %v1504
    %v1543 = vpack.c.bf16 %v1509, %v1507
    %v1544 = vpack.c.bf16 %v1510, %v1508
    %v1545 = vpack.c.bf16 %v1513, %v1511
    %v1546 = vpack.c.bf16 %v1514, %v1512
    %v1547 = vld [vmem:[%s9] sm:$0xff]
    %v1548 = vld [vmem:[%s9 + $0x8] sm:$0xff]
    %v1549 = vld [vmem:[%s9 + $0x10] sm:$0xff]
    %v1550 = vld [vmem:[%s9 + $0x18] sm:$0xff]
    %v1551 = vld [vmem:[%s9 + $0x20] sm:$0xff]
    %v1552 = vld [vmem:[%s9 + $0x28] sm:$0xff]
    %v1553 = vld [vmem:[%s9 + $0x30] sm:$0xff]
    %v1554 = vld [vmem:[%s9 + $0x38] sm:$0xff]
    %v1555 = vld [vmem:[%s9 + $0x40] sm:$0xff]
    %v1556 = vld [vmem:[%s9 + $0x48] sm:$0xff]
    %v1557 = vld [vmem:[%s9 + $0x50] sm:$0xff]
    %v1558 = vld [vmem:[%s9 + $0x58] sm:$0xff]
    %v1559 = vld [vmem:[%s9 + $0x60] sm:$0xff]
    %v1560 = vld [vmem:[%s9 + $0x68] sm:$0xff]
    %v1561 = vld [vmem:[%s9 + $0x70] sm:$0xff]
    %v1562 = vld [vmem:[%s9 + $0x78] sm:$0xff]
    %v1563 = vld [vmem:[%s9 + $0x80] sm:$0xff]
    %v1564 = vld [vmem:[%s9 + $0x88] sm:$0xff]
    %v1565 = vld [vmem:[%s9 + $0x90] sm:$0xff]
    %v1566 = vld [vmem:[%s9 + $0x98] sm:$0xff]
    %v1567 = vld [vmem:[%s9 + $0xa0] sm:$0xff]
    %v1568 = vld [vmem:[%s9 + $0xa8] sm:$0xff]
    %v1569 = vld [vmem:[%s9 + $0xb0] sm:$0xff]
    %v1570 = vld [vmem:[%s9 + $0xb8] sm:$0xff]
    %v1571 = vld [vmem:[%s9 + $0xc0] sm:$0xff]
    %v1572 = vld [vmem:[%s9 + $0xc8] sm:$0xff]
    %v1573 = vld [vmem:[%s9 + $0xd0] sm:$0xff]
    %v1574 = vld [vmem:[%s9 + $0xd8] sm:$0xff]
    %v1575 = vld [vmem:[%s9 + $0xe0] sm:$0xff]
    %v1576 = vld [vmem:[%s9 + $0xe8] sm:$0xff]
    %v1577 = vld [vmem:[%s9 + $0xf0] sm:$0xff]
    %v1578 = vld [vmem:[%s9 + $0xf8] sm:$0xff]
    %v1595 = vunpack.c.l.b16 %v1515
    %v1596 = vunpack.c.l.b16 %v1516
    %v1597 = vunpack.c.l.b16 %v1517
    %v1598 = vunpack.c.l.b16 %v1518
    %v1599 = vunpack.c.l.b16 %v1519
    %v1600 = vunpack.c.l.b16 %v1520
    %v1601 = vunpack.c.l.b16 %v1521
    %v1602 = vunpack.c.l.b16 %v1522
    %v1603 = vunpack.c.l.b16 %v1523
    %v1604 = vunpack.c.l.b16 %v1524
    %v1605 = vunpack.c.l.b16 %v1525
    %v1606 = vunpack.c.l.b16 %v1526
    %v1607 = vunpack.c.l.b16 %v1527
    %v1608 = vunpack.c.l.b16 %v1528
    %v1609 = vunpack.c.l.b16 %v1529
    %v1610 = vunpack.c.l.b16 %v1530
    %v1611 = vpack.c.b16 %v1596, %v1595
    %v1612 = vpack.c.b16 %v1598, %v1597
    %v1613 = vpack.c.b16 %v1600, %v1599
    %v1614 = vpack.c.b16 %v1602, %v1601
    %v1615 = vpack.c.b16 %v1604, %v1603
    %v1616 = vpack.c.b16 %v1606, %v1605
    %v1617 = vpack.c.b16 %v1608, %v1607
    %v1618 = vpack.c.b16 %v1610, %v1609
    %1627 = vmatprep.subr.bf16.mxu0 %v1546
    %1628 = vmatpush1.bf16.msra.mxu0 %v1545
    %1629 = vmatprep.subr.bf16.mxu0 %v1544
    %1630 = vmatpush1.bf16.msra.mxu0 %v1543
    %1631 = vmatprep.subr.bf16.mxu0 %v1542
    %1632 = vmatpush1.bf16.msra.mxu0 %v1541
    %1633 = vmatprep.subr.bf16.mxu0 %v1540
    %1634 = vmatpush1.bf16.msra.mxu0 %v1539
    %1635 = vmatprep.subr.bf16.mxu0 %v1538
    %1636 = vmatpush1.bf16.msra.mxu0 %v1537
    %1637 = vmatprep.subr.bf16.mxu0 %v1536
    %1638 = vmatpush1.bf16.msra.mxu0 %v1535
    %1639 = vmatprep.subr.bf16.mxu0 %v1534
    %1640 = vmatpush1.bf16.msra.mxu0 %v1533
    %1641 = vmatprep.subr.bf16.mxu0 %v1532
    %1642 = vmatpush1.bf16.msra.mxu0 %v1531
    %1643 = vmatprep.subr.bf16.mxu0 0
    %1644 = vmatpush2.bf16.msra.mxu0 0
    %1645 = vmatprep.subr.bf16.mxu0 0
    %1646 = vmatpush2.bf16.msra.mxu0 0
    %1647 = vmatprep.subr.bf16.mxu0 0
    %1648 = vmatpush2.bf16.msra.mxu0 0
    %1649 = vmatprep.subr.bf16.mxu0 0
    %1650 = vmatpush2.bf16.msra.mxu0 0
    %1651 = vmatprep.subr.bf16.mxu0 0
    %1652 = vmatpush2.bf16.msra.mxu0 0
    %1653 = vmatprep.subr.bf16.mxu0 0
    %1654 = vmatpush2.bf16.msra.mxu0 0
    %1655 = vmatprep.subr.bf16.mxu0 0
    %1656 = vmatpush2.bf16.msra.mxu0 0
    %1657 = vmatprep.subr.bf16.mxu0 0
    %1658 = vmatpush2.bf16.msra.mxu0 0
    %1659 = vmatprep.mubr.bf16.mxu0 0
    %1660 = vmatmul.mubr.bf16.gmra.mxu0 %v1611
    %v1661 = vpop.f32.mrf.mxu0
    %v1662 = vadd.f32 %v1547, %v1661
    %v1663 = vpop.f32.mrf.mxu0
    %v1664 = vadd.f32 %v1548, %v1663
    %v1665 = vpop.f32.mrf.mxu0
    %v1666 = vadd.f32 %v1549, %v1665
    %v1667 = vpop.f32.mrf.mxu0
    %v1668 = vadd.f32 %v1550, %v1667
    %1669 = vmatprep.mubr.bf16.mxu0 0
    %1670 = vmatmul.mubr.bf16.gmra.mxu0 %v1612
    %v1671 = vpop.f32.mrf.mxu0
    %v1672 = vadd.f32 %v1551, %v1671
    %v1673 = vpop.f32.mrf.mxu0
    %v1674 = vadd.f32 %v1552, %v1673
    %v1675 = vpop.f32.mrf.mxu0
    %v1676 = vadd.f32 %v1553, %v1675
    %v1677 = vpop.f32.mrf.mxu0
    %v1678 = vadd.f32 %v1554, %v1677
    %1679 = vmatprep.mubr.bf16.mxu0 0
    %1680 = vmatmul.mubr.bf16.gmra.mxu0 %v1613
    %v1681 = vpop.f32.mrf.mxu0
    %v1682 = vadd.f32 %v1555, %v1681
    %v1683 = vpop.f32.mrf.mxu0
    %v1684 = vadd.f32 %v1556, %v1683
    %v1685 = vpop.f32.mrf.mxu0
    %v1686 = vadd.f32 %v1557, %v1685
    %v1687 = vpop.f32.mrf.mxu0
    %v1688 = vadd.f32 %v1558, %v1687
    %1689 = vmatprep.mubr.bf16.mxu0 0
    %1690 = vmatmul.mubr.bf16.gmra.mxu0 %v1614
    %v1691 = vpop.f32.mrf.mxu0
    %v1692 = vadd.f32 %v1559, %v1691
    %v1693 = vpop.f32.mrf.mxu0
    %v1694 = vadd.f32 %v1560, %v1693
    %v1695 = vpop.f32.mrf.mxu0
    %v1696 = vadd.f32 %v1561, %v1695
    %v1697 = vpop.f32.mrf.mxu0
    %v1698 = vadd.f32 %v1562, %v1697
    %1699 = vmatprep.mubr.bf16.mxu0 0
    %1700 = vmatmul.mubr.bf16.gmra.mxu0 %v1615
    %v1701 = vpop.f32.mrf.mxu0
    %v1702 = vadd.f32 %v1563, %v1701
    %v1703 = vpop.f32.mrf.mxu0
    %v1704 = vadd.f32 %v1564, %v1703
    %v1705 = vpop.f32.mrf.mxu0
    %v1706 = vadd.f32 %v1565, %v1705
    %v1707 = vpop.f32.mrf.mxu0
    %v1708 = vadd.f32 %v1566, %v1707
    %1709 = vmatprep.mubr.bf16.mxu0 0
    %1710 = vmatmul.mubr.bf16.gmra.mxu0 %v1616
    %v1711 = vpop.f32.mrf.mxu0
    %v1712 = vadd.f32 %v1567, %v1711
    %v1713 = vpop.f32.mrf.mxu0
    %v1714 = vadd.f32 %v1568, %v1713
    %v1715 = vpop.f32.mrf.mxu0
    %v1716 = vadd.f32 %v1569, %v1715
    %v1717 = vpop.f32.mrf.mxu0
    %v1718 = vadd.f32 %v1570, %v1717
    %1719 = vmatprep.mubr.bf16.mxu0 0
    %1720 = vmatmul.mubr.bf16.gmra.mxu0 %v1617
    %v1721 = vpop.f32.mrf.mxu0
    %v1722 = vadd.f32 %v1571, %v1721
    %v1723 = vpop.f32.mrf.mxu0
    %v1724 = vadd.f32 %v1572, %v1723
    %v1725 = vpop.f32.mrf.mxu0
    %v1726 = vadd.f32 %v1573, %v1725
    %v1727 = vpop.f32.mrf.mxu0
    %v1728 = vadd.f32 %v1574, %v1727
    %1729 = vmatprep.mubr.bf16.mxu0 0
    %1730 = vmatmul.mubr.bf16.gmra.mxu0 %v1618
    %v1731 = vpop.f32.mrf.mxu0
    %v1732 = vadd.f32 %v1575, %v1731
    %v1733 = vpop.f32.mrf.mxu0
    %v1734 = vadd.f32 %v1576, %v1733
    %v1735 = vpop.f32.mrf.mxu0
    %v1736 = vadd.f32 %v1577, %v1735
    %v1737 = vpop.f32.mrf.mxu0
    %v1738 = vadd.f32 %v1578, %v1737
    %1739 = vdwg.mxu0
    %v1740 = vmax.f32 %v1662, 0.0
    %v1741 = vmax.f32 %v1664, 0.0
    %v1742 = vmax.f32 %v1666, 0.0
    %v1743 = vmax.f32 %v1668, 0.0
    %v1744 = vmax.f32 %v1672, 0.0
    %v1745 = vmax.f32 %v1674, 0.0
    %v1746 = vmax.f32 %v1676, 0.0
    %v1747 = vmax.f32 %v1678, 0.0
    %v1748 = vmax.f32 %v1682, 0.0
    %v1749 = vmax.f32 %v1684, 0.0
    %v1750 = vmax.f32 %v1686, 0.0
    %v1751 = vmax.f32 %v1688, 0.0
    %v1752 = vmax.f32 %v1692, 0.0
    %v1753 = vmax.f32 %v1694, 0.0
    %v1754 = vmax.f32 %v1696, 0.0
    %v1755 = vmax.f32 %v1698, 0.0
    %v1756 = vmax.f32 %v1702, 0.0
    %v1757 = vmax.f32 %v1704, 0.0
    %v1758 = vmax.f32 %v1706, 0.0
    %v1759 = vmax.f32 %v1708, 0.0
    %v1760 = vmax.f32 %v1712, 0.0
    %v1761 = vmax.f32 %v1714, 0.0
    %v1762 = vmax.f32 %v1716, 0.0
    %v1763 = vmax.f32 %v1718, 0.0
    %v1764 = vmax.f32 %v1722, 0.0
    %v1765 = vmax.f32 %v1724, 0.0
    %v1766 = vmax.f32 %v1726, 0.0
    %v1767 = vmax.f32 %v1728, 0.0
    %v1768 = vmax.f32 %v1732, 0.0
    %v1769 = vmax.f32 %v1734, 0.0
    %v1770 = vmax.f32 %v1736, 0.0
    %v1771 = vmax.f32 %v1738, 0.0
    %v1772 = vld [vmem:[#allocation13] sm:$0xf]
    %v1773 = vpack.c.bf16 %v1742, %v1740
    %v1774 = vpack.c.bf16 %v1743, %v1741
    %v1775 = vpack.c.bf16 %v1746, %v1744
    %v1776 = vpack.c.bf16 %v1747, %v1745
    %v1777 = vpack.c.bf16 %v1750, %v1748
    %v1778 = vpack.c.bf16 %v1751, %v1749
    %v1779 = vpack.c.bf16 %v1754, %v1752
    %v1780 = vpack.c.bf16 %v1755, %v1753
    %v1781 = vpack.c.bf16 %v1758, %v1756
    %v1782 = vpack.c.bf16 %v1759, %v1757
    %v1783 = vpack.c.bf16 %v1762, %v1760
    %v1784 = vpack.c.bf16 %v1763, %v1761
    %v1785 = vpack.c.bf16 %v1766, %v1764
    %v1786 = vpack.c.bf16 %v1767, %v1765
    %v1787 = vpack.c.bf16 %v1770, %v1768
    %v1788 = vpack.c.bf16 %v1771, %v1769
    %v1789 = vld [vmem:[#allocation15] sm:$0xff]
    %v1790 = vld [vmem:[#allocation15 + $0x8] sm:$0xff]
    %1791 = vmatprep.subr.bf16.mxu0 %v1788
    %1792 = vmatpush1.bf16.msra.mxu0 %v1787
    %1793 = vmatprep.subr.bf16.mxu0 %v1786
    %1794 = vmatpush1.bf16.msra.mxu0 %v1785
    %1795 = vmatprep.subr.bf16.mxu0 %v1784
    %1796 = vmatpush1.bf16.msra.mxu0 %v1783
    %1797 = vmatprep.subr.bf16.mxu0 %v1782
    %1798 = vmatpush1.bf16.msra.mxu0 %v1781
    %1799 = vmatprep.subr.bf16.mxu0 %v1780
    %1800 = vmatpush1.bf16.msra.mxu0 %v1779
    %1801 = vmatprep.subr.bf16.mxu0 %v1778
    %1802 = vmatpush1.bf16.msra.mxu0 %v1777
    %1803 = vmatprep.subr.bf16.mxu0 %v1776
    %1804 = vmatpush1.bf16.msra.mxu0 %v1775
    %1805 = vmatprep.subr.bf16.mxu0 %v1774
    %1806 = vmatpush1.bf16.msra.mxu0 %v1773
    %1807 = vmatprep.subr.bf16.mxu0 0
    %1808 = vmatpush2.bf16.msra.mxu0 0
    %1809 = vmatprep.subr.bf16.mxu0 0
    %1810 = vmatpush2.bf16.msra.mxu0 0
    %1811 = vmatprep.subr.bf16.mxu0 0
    %1812 = vmatpush2.bf16.msra.mxu0 0
    %1813 = vmatprep.subr.bf16.mxu0 0
    %1814 = vmatpush2.bf16.msra.mxu0 0
    %1815 = vmatprep.subr.bf16.mxu0 0
    %1816 = vmatpush2.bf16.msra.mxu0 0
    %1817 = vmatprep.subr.bf16.mxu0 0
    %1818 = vmatpush2.bf16.msra.mxu0 0
    %1819 = vmatprep.subr.bf16.mxu0 0
    %1820 = vmatpush2.bf16.msra.mxu0 0
    %1821 = vmatprep.subr.bf16.mxu0 0
    %1822 = vmatpush2.bf16.msra.mxu0 0
    %1823 = vmatprep.mubr.bf16.mxu0 0
    %1824 = vmatmul.mubr.bf16.gmra.mxu0 %v1772
    %v1825 = vpop.f32.mrf.mxu0
    %v1826 = vadd.f32 %v1789, %v1825
    %v1827 = vpop.f32.mrf.mxu0
    %v1828 = vadd.f32 %v1790, %v1827
    %v1829 = vpop.f32.mrf.mxu0
    %v1830 = vpop.f32.mrf.mxu0
    %1831 = vdwg.mxu0
    %v1832 = vtanh.pop %v1826
    %v1833 = vtanh.pop %v1828
    %v1834 = vld [vmem:[%s12] sm:$0xff]
    %v1835 = vld [vmem:[%s12 + $0x8] sm:$0xff]
    %v1836 = vadd.f32 %v1834, %v1832
    %v1837 = vadd.f32 %v1835, %v1833
    %1838 = vst [vmem:[%s13] sm:$0xff] %v1836
    %1839 = vst [vmem:[%s13 + $0x8] sm:$0xff] %v1837
    // Predicated region
    $region90: #{decoder.1} parent=1 // pred_check
      _
    $region91: #{decoder.1} parent=1 // pred_check_branch
      %1841 = sbr.rel (0) target = $region93
    $region92: #{decoder.1} parent=1 // pred_region
      _
    $region93: #{decoder.1} parent=1 // pred_fallthru
      _
    // Predicated region
    $region94: #{decoder.1} parent=1 // pred_check
      _
    $region95: #{decoder.1} parent=1 // pred_check_branch
      %1843 = sbr.rel (0) target = $region97
    $region96: #{decoder.1} parent=1 // pred_region
      _
    $region97: #{decoder.1} parent=1 // pred_fallthru
      _
    %1844 = vsyncpa [#allocation3], 1
    %1845 = vsyncpa [#allocation5], 1
    %1846 = vsyncpa [#allocation8], 1
    %1847 = vsyncpa [#allocation11], 1
    %1848 = vsyncpa [#allocation14], 1

</llo_original>
